<compile_context>
chip_gen: v7x
topology: tpu7x:2x2x1
jax: 0.10.0
libtpu: 0.0.40
codegen_flags: <defaults>
</compile_context>

<pallas_src>
import functools

import numpy as np

import jax
import jax.numpy as jnp
from jax import lax
from jax.experimental import pallas as pl
from jax.experimental.pallas import tpu as pltpu

BN_EPS = 1e-5


def _round_up(x, m):
    return ((x + m - 1) // m) * m


# ---------------------------------------------------------------------------
# Host-side banded weight construction (kw taps + width padding / s=2 dilation
# folded into the matmul RHS; kh taps stacked so each conv is ONE matmul).
# ---------------------------------------------------------------------------
def _banded_same_conv_stacked(w_hwio, W, kp):
    """3x3 'same' conv -> single stacked banded matrix (3*kp, W*Cout).

    Row block kh*kp + (wi*Cin + c) pairs with the kh-shifted copy of the input
    occupying lanes [kh*kp, (kh+1)*kp) of the fused LHS (lanes >= W*Cin are
    zero padding).
    """
    _, _, cin, cout = w_hwio.shape
    assert kp >= W * cin
    r = np.zeros((3, kp, W * cout), np.float32)
    for kh in range(3):
        for kw in range(3):
            for wo in range(W):
                wi = wo + kw - 1                      # width zero-pad folded in
                if 0 <= wi < W:
                    r[kh, wi * cin:(wi + 1) * cin,
                      wo * cout:(wo + 1) * cout] = w_hwio[kh, kw]
    return r.reshape(3 * kp, W * cout)


def _banded_convT_s2_stacked(w_flipped_hwio, W):
    """ConvTranspose(k=3,s=2,p=1,op=1) -> single matrix (W*Cin, 3*2W*Cout).

    Column block kh holds the kh-tap phase matrix; the width dilation/padding
    is folded in here, the row phases are handled in-kernel (even output rows
    use block 1, odd rows use block 0 of row i plus block 2 of row i+1).
    """
    _, _, cin, cout = w_flipped_hwio.shape
    m = np.zeros((3, W * cin, 2 * W * cout), np.float32)
    for kh in range(3):
        for kw in range(3):
            for j in range(W):
                wo = 2 * j + 1 - kw
                if 0 <= wo < 2 * W:
                    m[kh, j * cin:(j + 1) * cin,
                      wo * cout:(wo + 1) * cout] = w_flipped_hwio[kh, kw]
    return np.ascontiguousarray(
        m.transpose(1, 0, 2).reshape(W * cin, 3 * 2 * W * cout))


# ---------------------------------------------------------------------------
# Fused Pallas kernel: conv1+BN+ReLU -> conv2+BN+ReLU -> convT+BN+ReLU
# ---------------------------------------------------------------------------
def _fused_kernel(x_ref, r1_ref, r2_ref, m3_ref,
                  g12_ref, gt12_ref, g3_ref, gt3_ref,
                  gam1_ref, bet1_ref, gam2_ref, bet2_ref, gam3_ref, bet3_ref,
                  mtop_ref, mbot_ref, o_ref, *, N, H, W, C2, OC):
    f32 = jnp.float32
    L2 = W * C2
    L3 = 2 * W * OC
    lmax = mtop_ref.shape[1]

    mtop = mtop_ref[...]          # (N*H, lmax): 0.0 on first row of each image
    mbot = mbot_ref[...]          # (N*H, lmax): 0.0 on last  row of each image

    def _m(mask, width):          # static-width slice (no-op when widths match)
        return mask if width == lmax else mask[:, :width]

    def conv3x3(y, r_ref):
        # Fused single matmul: lane-concat the three kh-shifted copies of y
        # (128-aligned blocks) against the host-side stacked banded weights.
        width = y.shape[1]
        above = _m(mtop, width) * jnp.roll(y, 1, axis=0)
        below = _m(mbot, width) * jnp.roll(y, -1, axis=0)
        lhs = jnp.concatenate([above, y, below], axis=1)      # (N*H, 3*width)
        return jnp.dot(lhs, r_ref[...], preferred_element_type=f32)

    def bn_affine(colsum, colsq, g_ref, gt_ref, gam_ref, bet_ref, count):
        # Single-pass batch stats: one (2,L)x(L,C) stats matmul and one
        # (2,C)x(C,L) broadcast-back matmul per BN (conv bias already folded
        # out — it cancels exactly against the batch-mean subtraction).
        inv_n = 1.0 / count
        sums = jnp.concatenate([colsum, colsq], axis=0)               # (2, L)
        s = jnp.dot(sums, g_ref[...], preferred_element_type=f32)     # (2, C)
        mean = s[0:1] * inv_n
        var = jnp.maximum(s[1:2] * inv_n - mean * mean, 0.0)
        scale = gam_ref[...] * lax.rsqrt(var + BN_EPS)
        shift = bet_ref[...] - mean * scale
        ss = jnp.concatenate([scale, shift], axis=0)                  # (2, C)
        ssw = jnp.dot(ss, gt_ref[...], preferred_element_type=f32)    # (2, L)
        return ssw[0:1], ssw[1:2]

    cnt12 = float(N * H * W)
    cnt3 = float(N * (2 * H) * (2 * W))

    # ---- stage 1: Conv3x3 + BN + ReLU ----
    acc1 = conv3x3(x_ref[...], r1_ref)                               # (N*H, L2)
    sp, sh = bn_affine(jnp.sum(acc1, axis=0, keepdims=True),
                       jnp.sum(acc1 * acc1, axis=0, keepdims=True),
                       g12_ref, gt12_ref, gam1_ref, bet1_ref, cnt12)
    y1 = jnp.maximum(acc1 * sp + sh, 0.0)

    # ---- stage 2: Conv3x3 + BN + ReLU ----
    acc2 = conv3x3(y1, r2_ref)                                       # (N*H, L2)
    sp, sh = bn_affine(jnp.sum(acc2, axis=0, keepdims=True),
                       jnp.sum(acc2 * acc2, axis=0, keepdims=True),
                       g12_ref, gt12_ref, gam2_ref, bet2_ref, cnt12)
    y2 = jnp.maximum(acc2 * sp + sh, 0.0)

    # ---- stage 3: ConvTranspose(s=2) — one matmul, slice the three phases ---
    res = jnp.dot(y2, m3_ref[...], preferred_element_type=f32)     # (N*H, 3*L3)
    a = res[:, 0:L3]
    even = res[:, L3:2 * L3]                                       # rows 2i
    b = res[:, 2 * L3:3 * L3]
    odd = a + _m(mbot, L3) * jnp.roll(b, -1, axis=0)               # rows 2i+1
    sp, sh = bn_affine(
        jnp.sum(even, axis=0, keepdims=True) + jnp.sum(odd, axis=0, keepdims=True),
        jnp.sum(even * even, axis=0, keepdims=True)
        + jnp.sum(odd * odd, axis=0, keepdims=True),
        g3_ref, gt3_ref, gam3_ref, bet3_ref, cnt3)
    ye = jnp.maximum(even * sp + sh, 0.0)
    yo = jnp.maximum(odd * sp + sh, 0.0)

    # Lane-interleave the row phases: lanes [0:L3] = even row, [L3:2*L3] = odd.
    o_ref[...] = jnp.concatenate([ye, yo], axis=1)                 # (N*H, 2*L3)


@jax.jit
def _forward(x_nchw, skip_nchw, r1, r2, m3, g12, gt12, g3, gt3,
             gam1, bet1, gam2, bet2, gam3, bet3, mtop, mbot):
    N, cin, H, W = x_nchw.shape
    C2 = gam1.shape[1]
    OC = gam3.shape[1]
    L3 = 2 * W * OC
    lp_in = r1.shape[0] // 3

    # pack input: NCHW -> lane-packed (N*H, W*Cin), zero-padded to a 128 block
    x_p = (jnp.transpose(x_nchw, (0, 2, 3, 1)).astype(jnp.float32)
           .reshape(N * H, W * cin))
    if lp_in > W * cin:
        x_p = jnp.pad(x_p, ((0, 0), (0, lp_in - W * cin)))

    vmem = pl.BlockSpec(memory_space=pltpu.MemorySpace.VMEM)
    kernel = functools.partial(_fused_kernel, N=N, H=H, W=W, C2=C2, OC=OC)
    o = pl.pallas_call(
        kernel,
        out_shape=jax.ShapeDtypeStruct((N * H, 2 * L3), jnp.float32),
        in_specs=[vmem] * 16,
        out_specs=vmem,
    )(x_p, r1, r2, m3, g12, gt12, g3, gt3,
      gam1, bet1, gam2, bet2, gam3, bet3, mtop, mbot)

    # single XLA transpose to NCHW, then concat with the untouched skip tensor
    h3 = (jnp.transpose(o.reshape(N, H, 2, 2 * W, OC), (0, 4, 1, 2, 3))
          .reshape(N, OC, 2 * H, 2 * W))
    return jnp.concatenate([h3, skip_nchw.astype(jnp.float32)], axis=1)


class UpSampleLayerPallas:
    """Deterministically initialized Pallas equivalent of UpSampleLayer."""

    def __init__(self, in_ch, out_ch, key):
        self.in_ch, self.out_ch = in_ch, out_ch
        c2 = out_ch * 2
        ks = jax.random.split(key, 6)

        def he(k, shape, fan_in):
            w = np.asarray(jax.random.normal(k, shape, jnp.float32))
            return (w / np.sqrt(fan_in)).astype(np.float32)

        # Conv2d #1: PyTorch OIHW (c2, in_ch, 3, 3) -> HWIO
        self.w1 = np.transpose(he(ks[0], (c2, in_ch, 3, 3), in_ch * 9), (2, 3, 1, 0))
        self.b1 = (0.01 * np.asarray(jax.random.normal(ks[1], (c2,), jnp.float32))).astype(np.float32)
        # Conv2d #2: (c2, c2, 3, 3) -> HWIO
        self.w2 = np.transpose(he(ks[2], (c2, c2, 3, 3), c2 * 9), (2, 3, 1, 0))
        self.b2 = (0.01 * np.asarray(jax.random.normal(ks[3], (c2,), jnp.float32))).astype(np.float32)
        # ConvTranspose2d weight (in=c2, out=out_ch, 3, 3) -> spatially flipped HWIO
        w3 = he(ks[4], (c2, out_ch, 3, 3), c2 * 9)
        self.w3 = np.ascontiguousarray(
            np.transpose(w3, (2, 3, 0, 1))[::-1, ::-1, :, :]).astype(np.float32)
        self.b3 = (0.01 * np.asarray(jax.random.normal(ks[5], (out_ch,), jnp.float32))).astype(np.float32)

        self.g1 = jnp.ones((1, c2), jnp.float32)
        self.be1 = jnp.zeros((1, c2), jnp.float32)
        self.g2 = jnp.ones((1, c2), jnp.float32)
        self.be2 = jnp.zeros((1, c2), jnp.float32)
        self.g3 = jnp.ones((1, out_ch), jnp.float32)
        self.be3 = jnp.zeros((1, out_ch), jnp.float32)

        self._cache = {}

    def _derived(self, N, H, W):
        key = (N, H, W)
        if key not in self._cache:
            c2, oc = 2 * self.out_ch, self.out_ch
            lp_in = _round_up(W * self.in_ch, 128)        # stage-1 K block, 128-aligned
            l2 = W * c2
            l3 = 2 * W * oc
            lmax = max(lp_in, l2, l3)
            g12 = np.tile(np.eye(c2, dtype=np.float32), (W, 1))        # (W*c2, c2)
            g3 = np.tile(np.eye(oc, dtype=np.float32), (2 * W, 1))     # (2W*oc, oc)
            row = np.arange(N * H) % H
            mtop = np.repeat((row != 0).astype(np.float32)[:, None], lmax, axis=1)
            mbot = np.repeat((row != H - 1).astype(np.float32)[:, None], lmax, axis=1)
            self._cache[key] = dict(
                r1=jnp.asarray(_banded_same_conv_stacked(self.w1, W, lp_in)),
                r2=jnp.asarray(_banded_same_conv_stacked(self.w2, W, l2)),
                m3=jnp.asarray(_banded_convT_s2_stacked(self.w3, W)),
                g12=jnp.asarray(g12),
                gt12=jnp.asarray(np.ascontiguousarray(g12.T)),
                g3=jnp.asarray(g3),
                gt3=jnp.asarray(np.ascontiguousarray(g3.T)),
                mtop=jnp.asarray(mtop),
                mbot=jnp.asarray(mbot),
            )
        return self._cache[key]

    def __call__(self, x_nchw, skip_nchw):
        N, _, H, W = x_nchw.shape
        d = self._derived(N, H, W)
        return _forward(x_nchw, skip_nchw, d["r1"], d["r2"], d["m3"],
                        d["g12"], d["gt12"], d["g3"], d["gt3"],
                        self.g1, self.be1, self.g2, self.be2, self.g3, self.be3,
                        d["mtop"], d["mbot"])


# ---------------- pure-JAX reference (numerical verification) --------------
def _ref_stage(x, w, b, g, be, pad, lhs_dil):
    y = lax.conv_general_dilated(
        x, w, window_strides=(1, 1), padding=pad, lhs_dilation=lhs_dil,
        dimension_numbers=("NHWC", "HWIO", "NHWC"),
        precision=lax.Precision.HIGHEST) + b
    mean = jnp.mean(y, axis=(0, 1, 2), keepdims=True)
    var = jnp.mean((y - mean) ** 2, axis=(0, 1, 2), keepdims=True)
    y = (y - mean) * lax.rsqrt(var + BN_EPS) * g.reshape(-1) + be.reshape(-1)
    return jnp.maximum(y, 0.0)


def reference_forward(m, x_nchw, skip_nchw):
    x = jnp.transpose(x_nchw, (0, 2, 3, 1)).astype(jnp.float32)
    h1 = _ref_stage(x, jnp.asarray(m.w1), jnp.asarray(m.b1), m.g1, m.be1,
                    [(1, 1), (1, 1)], (1, 1))
    h2 = _ref_stage(h1, jnp.asarray(m.w2), jnp.asarray(m.b2), m.g2, m.be2,
                    [(1, 1), (1, 1)], (1, 1))
    h3 = _ref_stage(h2, jnp.asarray(m.w3), jnp.asarray(m.b3), m.g3, m.be3,
                    [(1, 2), (1, 2)], (2, 2))
    skip = jnp.transpose(skip_nchw, (0, 2, 3, 1)).astype(jnp.float32)
    cat = jnp.concatenate([h3, skip], axis=-1)
    return jnp.transpose(cat, (0, 3, 1, 2))


if __name__ == "__main__":
    in_ch, out_ch = 4, 4
    N, H, W = 2, 16, 16

    key = jax.random.PRNGKey(0)
    k_x, k_skip, k_params = jax.random.split(key, 3)

    x = jax.random.normal(k_x, (N, in_ch, H, W), jnp.float32)
    skip = jax.random.normal(k_skip, (N, out_ch, 2 * H, 2 * W), jnp.float32)

    layer = UpSampleLayerPallas(in_ch, out_ch, k_params)

    out = jax.block_until_ready(layer(x, skip))
    assert out.shape == (N, 2 * out_ch, 2 * H, 2 * W), out.shape

    ref = jax.block_until_ready(reference_forward(layer, x, skip))
    err = float(jnp.max(jnp.abs(out - ref)))
    assert err < 1e-3, err

    print("KERNEL_OK")
</pallas_src>

<mosaic_0001>
module attributes {stable_mosaic.version = 11 : i64} {
  func.func @_fused_kernel(%arg0: memref<32x128xf32, #tpu.memory_space<vmem>>, %arg1: memref<384x128xf32, #tpu.memory_space<vmem>>, %arg2: memref<384x128xf32, #tpu.memory_space<vmem>>, %arg3: memref<128x384xf32, #tpu.memory_space<vmem>>, %arg4: memref<128x8xf32, #tpu.memory_space<vmem>>, %arg5: memref<8x128xf32, #tpu.memory_space<vmem>>, %arg6: memref<128x4xf32, #tpu.memory_space<vmem>>, %arg7: memref<4x128xf32, #tpu.memory_space<vmem>>, %arg8: memref<1x8xf32, #tpu.memory_space<vmem>>, %arg9: memref<1x8xf32, #tpu.memory_space<vmem>>, %arg10: memref<1x8xf32, #tpu.memory_space<vmem>>, %arg11: memref<1x8xf32, #tpu.memory_space<vmem>>, %arg12: memref<1x4xf32, #tpu.memory_space<vmem>>, %arg13: memref<1x4xf32, #tpu.memory_space<vmem>>, %arg14: memref<32x128xf32, #tpu.memory_space<vmem>>, %arg15: memref<32x128xf32, #tpu.memory_space<vmem>>, %arg16: memref<32x256xf32, #tpu.memory_space<vmem>>) attributes {dimension_semantics = [], scalar_prefetch = 0 : i64, scratch_operands = 0 : i64, tpu.core_type = #tpu.core_type<tc>} {
    %c0 = arith.constant 0 : index
    %c0_0 = arith.constant 0 : index
    %0 = vector.load %arg14[%c0, %c0_0] : memref<32x128xf32, #tpu.memory_space<vmem>>, vector<32x128xf32>
    %c0_1 = arith.constant 0 : index
    %c0_2 = arith.constant 0 : index
    %1 = vector.load %arg15[%c0_1, %c0_2] : memref<32x128xf32, #tpu.memory_space<vmem>>, vector<32x128xf32>
    %c0_3 = arith.constant 0 : index
    %c0_4 = arith.constant 0 : index
    %2 = vector.load %arg0[%c0_3, %c0_4] : memref<32x128xf32, #tpu.memory_space<vmem>>, vector<32x128xf32>
    %3 = vector.extract_strided_slice %2 {offsets = [31, 0], sizes = [1, 128], strides = [1, 1]} : vector<32x128xf32> to vector<1x128xf32>
    %4 = vector.extract_strided_slice %2 {offsets = [0, 0], sizes = [31, 128], strides = [1, 1]} : vector<32x128xf32> to vector<31x128xf32>
    %5 = tpu.concatenate %3, %4 in 0 : vector<1x128xf32>, vector<31x128xf32> -> vector<32x128xf32>
    %6 = arith.mulf %0, %5 : vector<32x128xf32>
    %7 = vector.extract_strided_slice %2 {offsets = [1, 0], sizes = [31, 128], strides = [1, 1]} : vector<32x128xf32> to vector<31x128xf32>
    %8 = vector.extract_strided_slice %2 {offsets = [0, 0], sizes = [1, 128], strides = [1, 1]} : vector<32x128xf32> to vector<1x128xf32>
    %9 = tpu.concatenate %7, %8 in 0 : vector<31x128xf32>, vector<1x128xf32> -> vector<32x128xf32>
    %10 = arith.mulf %1, %9 : vector<32x128xf32>
    %11 = tpu.concatenate %6, %2, %10 in 1 : vector<32x128xf32>, vector<32x128xf32>, vector<32x128xf32> -> vector<32x384xf32>
    %c0_5 = arith.constant 0 : index
    %c0_6 = arith.constant 0 : index
    %12 = vector.load %arg1[%c0_5, %c0_6] : memref<384x128xf32, #tpu.memory_space<vmem>>, vector<384x128xf32>
    %cst = arith.constant dense<0.000000e+00> : vector<32x128xf32>
    %13 = tpu.matmul %11, %12, %cst {dimension_numbers = #tpu.dot_dimension_numbers<[1], [0], [0], [1], [0, 0, 1, 1], [], []>} : vector<32x384xf32>, vector<384x128xf32>, vector<32x128xf32> -> vector<32x128xf32>
    %cst_7 = arith.constant dense<0.000000e+00> : vector<128xf32>
    %14 = vector.multi_reduction <add>, %13, %cst_7 [0] : vector<32x128xf32> to vector<128xf32>
    %15 = vector.shape_cast %14 : vector<128xf32> to vector<1x128xf32>
    %16 = arith.mulf %13, %13 : vector<32x128xf32>
    %cst_8 = arith.constant dense<0.000000e+00> : vector<128xf32>
    %17 = vector.multi_reduction <add>, %16, %cst_8 [0] : vector<32x128xf32> to vector<128xf32>
    %18 = vector.shape_cast %17 : vector<128xf32> to vector<1x128xf32>
    %19 = tpu.concatenate %15, %18 in 0 : vector<1x128xf32>, vector<1x128xf32> -> vector<2x128xf32>
    %c0_9 = arith.constant 0 : index
    %c0_10 = arith.constant 0 : index
    %20 = vector.load %arg4[%c0_9, %c0_10] : memref<128x8xf32, #tpu.memory_space<vmem>>, vector<128x8xf32>
    %cst_11 = arith.constant dense<0.000000e+00> : vector<2x8xf32>
    %21 = tpu.matmul %19, %20, %cst_11 {dimension_numbers = #tpu.dot_dimension_numbers<[1], [0], [0], [1], [0, 0, 1, 1], [], []>} : vector<2x128xf32>, vector<128x8xf32>, vector<2x8xf32> -> vector<2x8xf32>
    %22 = vector.extract_strided_slice %21 {offsets = [0, 0], sizes = [1, 8], strides = [1, 1]} : vector<2x8xf32> to vector<1x8xf32>
    %cst_12 = arith.constant 0.001953125 : f32
    %23 = vector.broadcast %cst_12 : f32 to vector<1x8xf32>
    %24 = arith.mulf %22, %23 : vector<1x8xf32>
    %25 = vector.extract_strided_slice %21 {offsets = [1, 0], sizes = [1, 8], strides = [1, 1]} : vector<2x8xf32> to vector<1x8xf32>
    %cst_13 = arith.constant 0.001953125 : f32
    %26 = vector.broadcast %cst_13 : f32 to vector<1x8xf32>
    %27 = arith.mulf %25, %26 : vector<1x8xf32>
    %28 = arith.mulf %24, %24 : vector<1x8xf32>
    %29 = arith.subf %27, %28 : vector<1x8xf32>
    %cst_14 = arith.constant 0.000000e+00 : f32
    %30 = vector.broadcast %cst_14 : f32 to vector<1x8xf32>
    %31 = arith.maximumf %29, %30 : vector<1x8xf32>
    %c0_15 = arith.constant 0 : index
    %c0_16 = arith.constant 0 : index
    %32 = vector.load %arg8[%c0_15, %c0_16] : memref<1x8xf32, #tpu.memory_space<vmem>>, vector<1x8xf32>
    %cst_17 = arith.constant 9.99999974E-6 : f32
    %33 = vector.broadcast %cst_17 : f32 to vector<1x8xf32>
    %34 = arith.addf %31, %33 : vector<1x8xf32>
    %35 = math.rsqrt %34 : vector<1x8xf32>
    %36 = arith.mulf %32, %35 : vector<1x8xf32>
    %c0_18 = arith.constant 0 : index
    %c0_19 = arith.constant 0 : index
    %37 = vector.load %arg9[%c0_18, %c0_19] : memref<1x8xf32, #tpu.memory_space<vmem>>, vector<1x8xf32>
    %38 = arith.mulf %24, %36 : vector<1x8xf32>
    %39 = arith.subf %37, %38 : vector<1x8xf32>
    %40 = tpu.concatenate %36, %39 in 0 : vector<1x8xf32>, vector<1x8xf32> -> vector<2x8xf32>
    %c0_20 = arith.constant 0 : index
    %c0_21 = arith.constant 0 : index
    %41 = vector.load %arg5[%c0_20, %c0_21] : memref<8x128xf32, #tpu.memory_space<vmem>>, vector<8x128xf32>
    %cst_22 = arith.constant dense<0.000000e+00> : vector<2x128xf32>
    %42 = tpu.matmul %40, %41, %cst_22 {dimension_numbers = #tpu.dot_dimension_numbers<[1], [0], [0], [1], [0, 0, 1, 1], [], []>} : vector<2x8xf32>, vector<8x128xf32>, vector<2x128xf32> -> vector<2x128xf32>
    %43 = vector.extract_strided_slice %42 {offsets = [0, 0], sizes = [1, 128], strides = [1, 1]} : vector<2x128xf32> to vector<1x128xf32>
    %44 = vector.extract_strided_slice %42 {offsets = [1, 0], sizes = [1, 128], strides = [1, 1]} : vector<2x128xf32> to vector<1x128xf32>
    %45 = vector.broadcast %43 : vector<1x128xf32> to vector<32x128xf32>
    %46 = arith.mulf %13, %45 : vector<32x128xf32>
    %47 = vector.broadcast %44 : vector<1x128xf32> to vector<32x128xf32>
    %48 = arith.addf %46, %47 : vector<32x128xf32>
    %cst_23 = arith.constant 0.000000e+00 : f32
    %49 = vector.broadcast %cst_23 : f32 to vector<32x128xf32>
    %50 = arith.maximumf %48, %49 : vector<32x128xf32>
    %51 = vector.extract_strided_slice %50 {offsets = [31, 0], sizes = [1, 128], strides = [1, 1]} : vector<32x128xf32> to vector<1x128xf32>
    %52 = vector.extract_strided_slice %50 {offsets = [0, 0], sizes = [31, 128], strides = [1, 1]} : vector<32x128xf32> to vector<31x128xf32>
    %53 = tpu.concatenate %51, %52 in 0 : vector<1x128xf32>, vector<31x128xf32> -> vector<32x128xf32>
    %54 = arith.mulf %0, %53 : vector<32x128xf32>
    %55 = vector.extract_strided_slice %50 {offsets = [1, 0], sizes = [31, 128], strides = [1, 1]} : vector<32x128xf32> to vector<31x128xf32>
    %56 = vector.extract_strided_slice %50 {offsets = [0, 0], sizes = [1, 128], strides = [1, 1]} : vector<32x128xf32> to vector<1x128xf32>
    %57 = tpu.concatenate %55, %56 in 0 : vector<31x128xf32>, vector<1x128xf32> -> vector<32x128xf32>
    %58 = arith.mulf %1, %57 : vector<32x128xf32>
    %59 = tpu.concatenate %54, %50, %58 in 1 : vector<32x128xf32>, vector<32x128xf32>, vector<32x128xf32> -> vector<32x384xf32>
    %c0_24 = arith.constant 0 : index
    %c0_25 = arith.constant 0 : index
    %60 = vector.load %arg2[%c0_24, %c0_25] : memref<384x128xf32, #tpu.memory_space<vmem>>, vector<384x128xf32>
    %cst_26 = arith.constant dense<0.000000e+00> : vector<32x128xf32>
    %61 = tpu.matmul %59, %60, %cst_26 {dimension_numbers = #tpu.dot_dimension_numbers<[1], [0], [0], [1], [0, 0, 1, 1], [], []>} : vector<32x384xf32>, vector<384x128xf32>, vector<32x128xf32> -> vector<32x128xf32>
    %cst_27 = arith.constant dense<0.000000e+00> : vector<128xf32>
    %62 = vector.multi_reduction <add>, %61, %cst_27 [0] : vector<32x128xf32> to vector<128xf32>
    %63 = vector.shape_cast %62 : vector<128xf32> to vector<1x128xf32>
    %64 = arith.mulf %61, %61 : vector<32x128xf32>
    %cst_28 = arith.constant dense<0.000000e+00> : vector<128xf32>
    %65 = vector.multi_reduction <add>, %64, %cst_28 [0] : vector<32x128xf32> to vector<128xf32>
    %66 = vector.shape_cast %65 : vector<128xf32> to vector<1x128xf32>
    %67 = tpu.concatenate %63, %66 in 0 : vector<1x128xf32>, vector<1x128xf32> -> vector<2x128xf32>
    %c0_29 = arith.constant 0 : index
    %c0_30 = arith.constant 0 : index
    %68 = vector.load %arg4[%c0_29, %c0_30] : memref<128x8xf32, #tpu.memory_space<vmem>>, vector<128x8xf32>
    %cst_31 = arith.constant dense<0.000000e+00> : vector<2x8xf32>
    %69 = tpu.matmul %67, %68, %cst_31 {dimension_numbers = #tpu.dot_dimension_numbers<[1], [0], [0], [1], [0, 0, 1, 1], [], []>} : vector<2x128xf32>, vector<128x8xf32>, vector<2x8xf32> -> vector<2x8xf32>
    %70 = vector.extract_strided_slice %69 {offsets = [0, 0], sizes = [1, 8], strides = [1, 1]} : vector<2x8xf32> to vector<1x8xf32>
    %cst_32 = arith.constant 0.001953125 : f32
    %71 = vector.broadcast %cst_32 : f32 to vector<1x8xf32>
    %72 = arith.mulf %70, %71 : vector<1x8xf32>
    %73 = vector.extract_strided_slice %69 {offsets = [1, 0], sizes = [1, 8], strides = [1, 1]} : vector<2x8xf32> to vector<1x8xf32>
    %cst_33 = arith.constant 0.001953125 : f32
    %74 = vector.broadcast %cst_33 : f32 to vector<1x8xf32>
    %75 = arith.mulf %73, %74 : vector<1x8xf32>
    %76 = arith.mulf %72, %72 : vector<1x8xf32>
    %77 = arith.subf %75, %76 : vector<1x8xf32>
    %cst_34 = arith.constant 0.000000e+00 : f32
    %78 = vector.broadcast %cst_34 : f32 to vector<1x8xf32>
    %79 = arith.maximumf %77, %78 : vector<1x8xf32>
    %c0_35 = arith.constant 0 : index
    %c0_36 = arith.constant 0 : index
    %80 = vector.load %arg10[%c0_35, %c0_36] : memref<1x8xf32, #tpu.memory_space<vmem>>, vector<1x8xf32>
    %cst_37 = arith.constant 9.99999974E-6 : f32
    %81 = vector.broadcast %cst_37 : f32 to vector<1x8xf32>
    %82 = arith.addf %79, %81 : vector<1x8xf32>
    %83 = math.rsqrt %82 : vector<1x8xf32>
    %84 = arith.mulf %80, %83 : vector<1x8xf32>
    %c0_38 = arith.constant 0 : index
    %c0_39 = arith.constant 0 : index
    %85 = vector.load %arg11[%c0_38, %c0_39] : memref<1x8xf32, #tpu.memory_space<vmem>>, vector<1x8xf32>
    %86 = arith.mulf %72, %84 : vector<1x8xf32>
    %87 = arith.subf %85, %86 : vector<1x8xf32>
    %88 = tpu.concatenate %84, %87 in 0 : vector<1x8xf32>, vector<1x8xf32> -> vector<2x8xf32>
    %c0_40 = arith.constant 0 : index
    %c0_41 = arith.constant 0 : index
    %89 = vector.load %arg5[%c0_40, %c0_41] : memref<8x128xf32, #tpu.memory_space<vmem>>, vector<8x128xf32>
    %cst_42 = arith.constant dense<0.000000e+00> : vector<2x128xf32>
    %90 = tpu.matmul %88, %89, %cst_42 {dimension_numbers = #tpu.dot_dimension_numbers<[1], [0], [0], [1], [0, 0, 1, 1], [], []>} : vector<2x8xf32>, vector<8x128xf32>, vector<2x128xf32> -> vector<2x128xf32>
    %91 = vector.extract_strided_slice %90 {offsets = [0, 0], sizes = [1, 128], strides = [1, 1]} : vector<2x128xf32> to vector<1x128xf32>
    %92 = vector.extract_strided_slice %90 {offsets = [1, 0], sizes = [1, 128], strides = [1, 1]} : vector<2x128xf32> to vector<1x128xf32>
    %93 = vector.broadcast %91 : vector<1x128xf32> to vector<32x128xf32>
    %94 = arith.mulf %61, %93 : vector<32x128xf32>
    %95 = vector.broadcast %92 : vector<1x128xf32> to vector<32x128xf32>
    %96 = arith.addf %94, %95 : vector<32x128xf32>
    %cst_43 = arith.constant 0.000000e+00 : f32
    %97 = vector.broadcast %cst_43 : f32 to vector<32x128xf32>
    %98 = arith.maximumf %96, %97 : vector<32x128xf32>
    %c0_44 = arith.constant 0 : index
    %c0_45 = arith.constant 0 : index
    %99 = vector.load %arg3[%c0_44, %c0_45] : memref<128x384xf32, #tpu.memory_space<vmem>>, vector<128x384xf32>
    %cst_46 = arith.constant dense<0.000000e+00> : vector<32x384xf32>
    %100 = tpu.matmul %98, %99, %cst_46 {dimension_numbers = #tpu.dot_dimension_numbers<[1], [0], [0], [1], [0, 0, 1, 1], [], []>} : vector<32x128xf32>, vector<128x384xf32>, vector<32x384xf32> -> vector<32x384xf32>
    %101 = vector.extract_strided_slice %100 {offsets = [0, 0], sizes = [32, 128], strides = [1, 1]} : vector<32x384xf32> to vector<32x128xf32>
    %102 = vector.extract_strided_slice %100 {offsets = [0, 128], sizes = [32, 128], strides = [1, 1]} : vector<32x384xf32> to vector<32x128xf32>
    %103 = vector.extract_strided_slice %100 {offsets = [0, 256], sizes = [32, 128], strides = [1, 1]} : vector<32x384xf32> to vector<32x128xf32>
    %104 = vector.extract_strided_slice %103 {offsets = [1, 0], sizes = [31, 128], strides = [1, 1]} : vector<32x128xf32> to vector<31x128xf32>
    %105 = vector.extract_strided_slice %103 {offsets = [0, 0], sizes = [1, 128], strides = [1, 1]} : vector<32x128xf32> to vector<1x128xf32>
    %106 = tpu.concatenate %104, %105 in 0 : vector<31x128xf32>, vector<1x128xf32> -> vector<32x128xf32>
    %107 = arith.mulf %1, %106 : vector<32x128xf32>
    %108 = arith.addf %101, %107 : vector<32x128xf32>
    %cst_47 = arith.constant dense<0.000000e+00> : vector<128xf32>
    %109 = vector.multi_reduction <add>, %102, %cst_47 [0] : vector<32x128xf32> to vector<128xf32>
    %110 = vector.shape_cast %109 : vector<128xf32> to vector<1x128xf32>
    %cst_48 = arith.constant dense<0.000000e+00> : vector<128xf32>
    %111 = vector.multi_reduction <add>, %108, %cst_48 [0] : vector<32x128xf32> to vector<128xf32>
    %112 = vector.shape_cast %111 : vector<128xf32> to vector<1x128xf32>
    %113 = arith.addf %110, %112 : vector<1x128xf32>
    %114 = arith.mulf %102, %102 : vector<32x128xf32>
    %cst_49 = arith.constant dense<0.000000e+00> : vector<128xf32>
    %115 = vector.multi_reduction <add>, %114, %cst_49 [0] : vector<32x128xf32> to vector<128xf32>
    %116 = vector.shape_cast %115 : vector<128xf32> to vector<1x128xf32>
    %117 = arith.mulf %108, %108 : vector<32x128xf32>
    %cst_50 = arith.constant dense<0.000000e+00> : vector<128xf32>
    %118 = vector.multi_reduction <add>, %117, %cst_50 [0] : vector<32x128xf32> to vector<128xf32>
    %119 = vector.shape_cast %118 : vector<128xf32> to vector<1x128xf32>
    %120 = arith.addf %116, %119 : vector<1x128xf32>
    %121 = tpu.concatenate %113, %120 in 0 : vector<1x128xf32>, vector<1x128xf32> -> vector<2x128xf32>
    %c0_51 = arith.constant 0 : index
    %c0_52 = arith.constant 0 : index
    %122 = vector.load %arg6[%c0_51, %c0_52] : memref<128x4xf32, #tpu.memory_space<vmem>>, vector<128x4xf32>
    %cst_53 = arith.constant dense<0.000000e+00> : vector<2x4xf32>
    %123 = tpu.matmul %121, %122, %cst_53 {dimension_numbers = #tpu.dot_dimension_numbers<[1], [0], [0], [1], [0, 0, 1, 1], [], []>} : vector<2x128xf32>, vector<128x4xf32>, vector<2x4xf32> -> vector<2x4xf32>
    %124 = vector.extract_strided_slice %123 {offsets = [0, 0], sizes = [1, 4], strides = [1, 1]} : vector<2x4xf32> to vector<1x4xf32>
    %cst_54 = arith.constant 4.8828125E-4 : f32
    %125 = vector.broadcast %cst_54 : f32 to vector<1x4xf32>
    %126 = arith.mulf %124, %125 : vector<1x4xf32>
    %127 = vector.extract_strided_slice %123 {offsets = [1, 0], sizes = [1, 4], strides = [1, 1]} : vector<2x4xf32> to vector<1x4xf32>
    %cst_55 = arith.constant 4.8828125E-4 : f32
    %128 = vector.broadcast %cst_55 : f32 to vector<1x4xf32>
    %129 = arith.mulf %127, %128 : vector<1x4xf32>
    %130 = arith.mulf %126, %126 : vector<1x4xf32>
    %131 = arith.subf %129, %130 : vector<1x4xf32>
    %cst_56 = arith.constant 0.000000e+00 : f32
    %132 = vector.broadcast %cst_56 : f32 to vector<1x4xf32>
    %133 = arith.maximumf %131, %132 : vector<1x4xf32>
    %c0_57 = arith.constant 0 : index
    %c0_58 = arith.constant 0 : index
    %134 = vector.load %arg12[%c0_57, %c0_58] : memref<1x4xf32, #tpu.memory_space<vmem>>, vector<1x4xf32>
    %cst_59 = arith.constant 9.99999974E-6 : f32
    %135 = vector.broadcast %cst_59 : f32 to vector<1x4xf32>
    %136 = arith.addf %133, %135 : vector<1x4xf32>
    %137 = math.rsqrt %136 : vector<1x4xf32>
    %138 = arith.mulf %134, %137 : vector<1x4xf32>
    %c0_60 = arith.constant 0 : index
    %c0_61 = arith.constant 0 : index
    %139 = vector.load %arg13[%c0_60, %c0_61] : memref<1x4xf32, #tpu.memory_space<vmem>>, vector<1x4xf32>
    %140 = arith.mulf %126, %138 : vector<1x4xf32>
    %141 = arith.subf %139, %140 : vector<1x4xf32>
    %142 = tpu.concatenate %138, %141 in 0 : vector<1x4xf32>, vector<1x4xf32> -> vector<2x4xf32>
    %c0_62 = arith.constant 0 : index
    %c0_63 = arith.constant 0 : index
    %143 = vector.load %arg7[%c0_62, %c0_63] : memref<4x128xf32, #tpu.memory_space<vmem>>, vector<4x128xf32>
    %cst_64 = arith.constant dense<0.000000e+00> : vector<2x128xf32>
    %144 = tpu.matmul %142, %143, %cst_64 {dimension_numbers = #tpu.dot_dimension_numbers<[1], [0], [0], [1], [0, 0, 1, 1], [], []>} : vector<2x4xf32>, vector<4x128xf32>, vector<2x128xf32> -> vector<2x128xf32>
    %145 = vector.extract_strided_slice %144 {offsets = [0, 0], sizes = [1, 128], strides = [1, 1]} : vector<2x128xf32> to vector<1x128xf32>
    %146 = vector.extract_strided_slice %144 {offsets = [1, 0], sizes = [1, 128], strides = [1, 1]} : vector<2x128xf32> to vector<1x128xf32>
    %147 = vector.broadcast %145 : vector<1x128xf32> to vector<32x128xf32>
    %148 = arith.mulf %102, %147 : vector<32x128xf32>
    %149 = vector.broadcast %146 : vector<1x128xf32> to vector<32x128xf32>
    %150 = arith.addf %148, %149 : vector<32x128xf32>
    %cst_65 = arith.constant 0.000000e+00 : f32
    %151 = vector.broadcast %cst_65 : f32 to vector<32x128xf32>
    %152 = arith.maximumf %150, %151 : vector<32x128xf32>
    %153 = vector.broadcast %145 : vector<1x128xf32> to vector<32x128xf32>
    %154 = arith.mulf %108, %153 : vector<32x128xf32>
    %155 = vector.broadcast %146 : vector<1x128xf32> to vector<32x128xf32>
    %156 = arith.addf %154, %155 : vector<32x128xf32>
    %cst_66 = arith.constant 0.000000e+00 : f32
    %157 = vector.broadcast %cst_66 : f32 to vector<32x128xf32>
    %158 = arith.maximumf %156, %157 : vector<32x128xf32>
    %159 = tpu.concatenate %152, %158 in 1 : vector<32x128xf32>, vector<32x128xf32> -> vector<32x256xf32>
    %c0_67 = arith.constant 0 : index
    %c0_68 = arith.constant 0 : index
    %160 = vector.load %arg16[%c0_67, %c0_68] : memref<32x256xf32, #tpu.memory_space<vmem>>, vector<32x256xf32>
    tpu.vector_store %arg16[%c0_67, %c0_68], %159 {strides = array<i32>} : memref<32x256xf32, #tpu.memory_space<vmem>>, vector<32x256xf32>,
    return
  }
}

</mosaic_0001>

<llo_original>
// kernel: _forward.1
$region0: #{_forward.1}
  #allocation0 [shape = 'u32[]', space=smem, size = 0x4, offset = 0x4, fixed_abs, tag = 'smem constant byte address 0x4 - core index']
  #allocation1 [shape = 'u32[144,128]{1,0:T(1,128)}', space=vmem, size = 0x12000, scoped, tag = 'internal scratch']
  %s0 = inlined_call_operand.vmem [shape: f32[32,128], index: 0, kind: input, shape index: {}]
  %s1 = inlined_call_operand.vmem [shape: f32[384,128], index: 1, kind: input, shape index: {}]
  %s2 = inlined_call_operand.vmem [shape: f32[384,128], index: 2, kind: input, shape index: {}]
  %s3 = inlined_call_operand.hbm [shape: f32[128,384], index: 3, kind: input, shape index: {}]
  %s4 = inlined_call_operand.vmem [shape: f32[128,8], index: 4, kind: input, shape index: {}]
  %s5 = inlined_call_operand.vmem [shape: f32[8,128], index: 5, kind: input, shape index: {}]
  %s6 = inlined_call_operand.vmem [shape: f32[128,4], index: 6, kind: input, shape index: {}]
  %s7 = inlined_call_operand.vmem [shape: f32[4,128], index: 7, kind: input, shape index: {}]
  %s8 = inlined_call_operand.vmem [shape: f32[1,8], index: 8, kind: input, shape index: {}]
  %s9 = inlined_call_operand.vmem [shape: f32[1,8], index: 9, kind: input, shape index: {}]
  %s10 = inlined_call_operand.vmem [shape: f32[1,8], index: 10, kind: input, shape index: {}]
  %s11 = inlined_call_operand.vmem [shape: f32[1,8], index: 11, kind: input, shape index: {}]
  %s12 = inlined_call_operand.vmem [shape: f32[1,4], index: 12, kind: input, shape index: {}]
  %s13 = inlined_call_operand.vmem [shape: f32[1,4], index: 13, kind: input, shape index: {}]
  %s14 = inlined_call_operand.vmem [shape: f32[32,128], index: 14, kind: input, shape index: {}]
  %s15 = inlined_call_operand.vmem [shape: f32[32,128], index: 15, kind: input, shape index: {}]
  %s16 = inlined_call_operand.vmem [shape: f32[32,256], index: 16, kind: output, shape index: {}]
  %s17 = sld [smem:[#allocation0]]
  $region78: #{_forward.1} parent=0
    _
  %s19 = ssub.s32 1, %s17
  %s20 = scalar_select 0, %s19, %s17
  $region1: #{_forward.1} parent=0
    #allocation2 [shape = 'u8[196608]{0}', space=vmem, size = 0x30000, scoped, tag = 'input window, operand 3, single buffered']
    #allocation3 [shape = 's32[1]{0}', space=sflag, size = 0x4, scoped, tag = 'scoped memory for _forward.1']
    %21 = vsyncpa [#allocation3], 0
    // Predicated region
    $region2: #{_forward.1} parent=1 // pred_check
      _
    $region3: #{_forward.1} parent=1 // pred_check_branch
      %23 = sbr.rel (0) target = $region5
    $region4: #{_forward.1} parent=1 // pred_region
      _
    $region5: #{_forward.1} parent=1 // pred_fallthru
      _
    // Predicated region
    $region6: #{_forward.1} parent=1 // pred_check
      _
    $region7: #{_forward.1} parent=1 // pred_check_branch
      %25 = sbr.rel (0) target = $region9
    $region8: #{_forward.1} parent=1 // pred_region
      _
    $region9: #{_forward.1} parent=1 // pred_fallthru
      _
    // Predicated region
    $region10: #{_forward.1} parent=1 // pred_check
      _
    $region11: #{_forward.1} parent=1 // pred_check_branch
      %27 = sbr.rel (0) target = $region13
    $region12: #{_forward.1} parent=1 // pred_region
      _
    $region13: #{_forward.1} parent=1 // pred_fallthru
      _
    // Predicated region
    $region14: #{_forward.1} parent=1 // pred_check
      _
    $region15: #{_forward.1} parent=1 // pred_check_branch
      %29 = sbr.rel (0) target = $region17
    $region16: #{_forward.1} parent=1 // pred_region
      %s31 = ssub.s32 6144, 6144
      %32 = vsyncadd [#allocation3], %s31
      %s33 = sshll.u32 [#allocation2], 4
      %s34 = int_to_ptr.vmem [resolvable:$true] %s33
      %39 = dma.hbm_to_vmem [thread:$0]  %s3, 6144, %s34, [#allocation3], 384, 384, 24
    $region17: #{_forward.1} parent=1 // pred_fallthru
      _
    // Predicated region
    $region18: #{_forward.1} parent=1 // pred_check
      _
    $region19: #{_forward.1} parent=1 // pred_check_branch
      %41 = sbr.rel (0) target = $region21
    $region20: #{_forward.1} parent=1 // pred_region
      _
    $region21: #{_forward.1} parent=1 // pred_fallthru
      _
    // Predicated region
    $region22: #{_forward.1} parent=1 // pred_check
      _
    $region23: #{_forward.1} parent=1 // pred_check_branch
      %43 = sbr.rel (0) target = $region25
    $region24: #{_forward.1} parent=1 // pred_region
      _
    $region25: #{_forward.1} parent=1 // pred_fallthru
      _
    // Predicated region
    $region26: #{_forward.1} parent=1 // pred_check
      _
    $region27: #{_forward.1} parent=1 // pred_check_branch
      %45 = sbr.rel (0) target = $region29
    $region28: #{_forward.1} parent=1 // pred_region
      _
    $region29: #{_forward.1} parent=1 // pred_fallthru
      _
    // Predicated region
    $region30: #{_forward.1} parent=1 // pred_check
      _
    $region31: #{_forward.1} parent=1 // pred_check_branch
      %47 = sbr.rel (0) target = $region33
    $region32: #{_forward.1} parent=1 // pred_region
      _
    $region33: #{_forward.1} parent=1 // pred_fallthru
      _
    // Predicated region
    $region34: #{_forward.1} parent=1 // pred_check
      _
    $region35: #{_forward.1} parent=1 // pred_check_branch
      %49 = sbr.rel (0) target = $region37
    $region36: #{_forward.1} parent=1 // pred_region
      _
    $region37: #{_forward.1} parent=1 // pred_fallthru
      _
    // Predicated region
    $region38: #{_forward.1} parent=1 // pred_check
      _
    $region39: #{_forward.1} parent=1 // pred_check_branch
      %51 = sbr.rel (0) target = $region41
    $region40: #{_forward.1} parent=1 // pred_region
      _
    $region41: #{_forward.1} parent=1 // pred_fallthru
      _
    // Predicated region
    $region42: #{_forward.1} parent=1 // pred_check
      _
    $region43: #{_forward.1} parent=1 // pred_check_branch
      %53 = sbr.rel (0) target = $region45
    $region44: #{_forward.1} parent=1 // pred_region
      _
    $region45: #{_forward.1} parent=1 // pred_fallthru
      _
    // Predicated region
    $region46: #{_forward.1} parent=1 // pred_check
      _
    $region47: #{_forward.1} parent=1 // pred_check_branch
      %55 = sbr.rel (0) target = $region49
    $region48: #{_forward.1} parent=1 // pred_region
      _
    $region49: #{_forward.1} parent=1 // pred_fallthru
      _
    // Predicated region
    $region50: #{_forward.1} parent=1 // pred_check
      _
    $region51: #{_forward.1} parent=1 // pred_check_branch
      %57 = sbr.rel (0) target = $region53
    $region52: #{_forward.1} parent=1 // pred_region
      _
    $region53: #{_forward.1} parent=1 // pred_fallthru
      _
    // Predicated region
    $region54: #{_forward.1} parent=1 // pred_check
      _
    $region55: #{_forward.1} parent=1 // pred_check_branch
      %59 = sbr.rel (0) target = $region57
    $region56: #{_forward.1} parent=1 // pred_region
      _
    $region57: #{_forward.1} parent=1 // pred_fallthru
      _
    // Predicated region
    $region58: #{_forward.1} parent=1 // pred_check
      _
    $region59: #{_forward.1} parent=1 // pred_check_branch
      %61 = sbr.rel (0) target = $region61
    $region60: #{_forward.1} parent=1 // pred_region
      _
    $region61: #{_forward.1} parent=1 // pred_fallthru
      _
    // Predicated region
    $region62: #{_forward.1} parent=1 // pred_check
      _
    $region63: #{_forward.1} parent=1 // pred_check_branch
      %63 = sbr.rel (0) target = $region65
    $region64: #{_forward.1} parent=1 // pred_region
      _
    $region65: #{_forward.1} parent=1 // pred_fallthru
      _
    // Predicated region
    $region66: #{_forward.1} parent=1 // pred_check
      _
    $region67: #{_forward.1} parent=1 // pred_check_branch
      %65 = sbr.rel (0) target = $region69
    $region68: #{_forward.1} parent=1 // pred_region
      %66 = dma.done [#allocation3], 6144
    $region69: #{_forward.1} parent=1 // pred_fallthru
      _
    %v67 = vld [vmem:[%s14] sm:$0xff]
    %v68 = vld [vmem:[%s14 + $0x8] sm:$0xff]
    %v69 = vld [vmem:[%s14 + $0x10] sm:$0xff]
    %v70 = vld [vmem:[%s14 + $0x18] sm:$0xff]
    %v71 = vld [vmem:[%s15] sm:$0xff]
    %v72 = vld [vmem:[%s15 + $0x8] sm:$0xff]
    %v73 = vld [vmem:[%s15 + $0x10] sm:$0xff]
    %v74 = vld [vmem:[%s15 + $0x18] sm:$0xff]
    %v75 = vld [vmem:[%s0] sm:$0xff]
    %v76 = vld [vmem:[%s0 + $0x8] sm:$0xff]
    %v77 = vld [vmem:[%s0 + $0x10] sm:$0xff]
    %v78 = vld [vmem:[%s0 + $0x18] sm:$0xff]
    %v80 = vrot.slane %v78, 7
    %vm85 = vcmask 1040384
    %v86 = vrot.slane %v75, 7
    %v87 = vrot.slane %v76, 7
    %v88 = vsel %vm85, %v86, %v87
    %v89 = vrot.slane %v77, 7
    %v90 = vsel %vm85, %v87, %v89
    %v91 = vsel %vm85, %v89, %v80
    %v96 = vsel %vm85, %v80, %v86
    %v97 = vmul.f32 %v67, %v96
    %v98 = vmul.f32 %v68, %v88
    %v99 = vmul.f32 %v69, %v90
    %v100 = vmul.f32 %v70, %v91
    %vm101 = vcmask 1046528
    %v102 = vrot.slane %v75, 1
    %v103 = vrot.slane %v76, 1
    %v104 = vsel %vm101, %v102, %v103
    %v105 = vrot.slane %v77, 1
    %v106 = vsel %vm101, %v103, %v105
    %v107 = vrot.slane %v78, 1
    %v108 = vsel %vm101, %v105, %v107
    %v114 = vsel %vm101, %v107, %v102
    %v115 = vmul.f32 %v71, %v104
    %v116 = vmul.f32 %v72, %v106
    %v117 = vmul.f32 %v73, %v108
    %v118 = vmul.f32 %v74, %v114
    %v119 = vld [vmem:[%s1] sm:$0xff]
    %v120 = vld [vmem:[%s1 + $0x8] sm:$0xff]
    %v121 = vld [vmem:[%s1 + $0x10] sm:$0xff]
    %v122 = vld [vmem:[%s1 + $0x18] sm:$0xff]
    %v123 = vld [vmem:[%s1 + $0x20] sm:$0xff]
    %v124 = vld [vmem:[%s1 + $0x28] sm:$0xff]
    %v125 = vld [vmem:[%s1 + $0x30] sm:$0xff]
    %v126 = vld [vmem:[%s1 + $0x38] sm:$0xff]
    %v127 = vld [vmem:[%s1 + $0x40] sm:$0xff]
    %v128 = vld [vmem:[%s1 + $0x48] sm:$0xff]
    %v129 = vld [vmem:[%s1 + $0x50] sm:$0xff]
    %v130 = vld [vmem:[%s1 + $0x58] sm:$0xff]
    %v131 = vld [vmem:[%s1 + $0x60] sm:$0xff]
    %v132 = vld [vmem:[%s1 + $0x68] sm:$0xff]
    %v133 = vld [vmem:[%s1 + $0x70] sm:$0xff]
    %v134 = vld [vmem:[%s1 + $0x78] sm:$0xff]
    %v135 = vld [vmem:[%s1 + $0x80] sm:$0xff]
    %v136 = vld [vmem:[%s1 + $0x88] sm:$0xff]
    %v137 = vld [vmem:[%s1 + $0x90] sm:$0xff]
    %v138 = vld [vmem:[%s1 + $0x98] sm:$0xff]
    %v139 = vld [vmem:[%s1 + $0xa0] sm:$0xff]
    %v140 = vld [vmem:[%s1 + $0xa8] sm:$0xff]
    %v141 = vld [vmem:[%s1 + $0xb0] sm:$0xff]
    %v142 = vld [vmem:[%s1 + $0xb8] sm:$0xff]
    %v143 = vld [vmem:[%s1 + $0xc0] sm:$0xff]
    %v144 = vld [vmem:[%s1 + $0xc8] sm:$0xff]
    %v145 = vld [vmem:[%s1 + $0xd0] sm:$0xff]
    %v146 = vld [vmem:[%s1 + $0xd8] sm:$0xff]
    %v147 = vld [vmem:[%s1 + $0xe0] sm:$0xff]
    %v148 = vld [vmem:[%s1 + $0xe8] sm:$0xff]
    %v149 = vld [vmem:[%s1 + $0xf0] sm:$0xff]
    %v150 = vld [vmem:[%s1 + $0xf8] sm:$0xff]
    %v151 = vld [vmem:[%s1 + $0x100] sm:$0xff]
    %v152 = vld [vmem:[%s1 + $0x108] sm:$0xff]
    %v153 = vld [vmem:[%s1 + $0x110] sm:$0xff]
    %v154 = vld [vmem:[%s1 + $0x118] sm:$0xff]
    %v155 = vld [vmem:[%s1 + $0x120] sm:$0xff]
    %v156 = vld [vmem:[%s1 + $0x128] sm:$0xff]
    %v157 = vld [vmem:[%s1 + $0x130] sm:$0xff]
    %v158 = vld [vmem:[%s1 + $0x138] sm:$0xff]
    %v159 = vld [vmem:[%s1 + $0x140] sm:$0xff]
    %v160 = vld [vmem:[%s1 + $0x148] sm:$0xff]
    %v161 = vld [vmem:[%s1 + $0x150] sm:$0xff]
    %v162 = vld [vmem:[%s1 + $0x158] sm:$0xff]
    %v163 = vld [vmem:[%s1 + $0x160] sm:$0xff]
    %v164 = vld [vmem:[%s1 + $0x168] sm:$0xff]
    %v165 = vld [vmem:[%s1 + $0x170] sm:$0xff]
    %v166 = vld [vmem:[%s1 + $0x178] sm:$0xff]
    %167 = vmatprep.subr.mxu0 0.0
    %168 = vmatpush1.msra.mxu0 %v119
    %169 = vmatprep.subr.mxu0 0.0
    %170 = vmatpush1.msra.mxu0 %v120
    %171 = vmatprep.subr.mxu0 0.0
    %172 = vmatpush1.msra.mxu0 %v121
    %173 = vmatprep.subr.mxu0 0.0
    %174 = vmatpush1.msra.mxu0 %v122
    %175 = vmatprep.subr.mxu0 0.0
    %176 = vmatpush1.msra.mxu0 %v123
    %177 = vmatprep.subr.mxu0 0.0
    %178 = vmatpush1.msra.mxu0 %v124
    %179 = vmatprep.subr.mxu0 0.0
    %180 = vmatpush1.msra.mxu0 %v125
    %181 = vmatprep.subr.mxu0 0.0
    %182 = vmatpush1.msra.mxu0 %v126
    %183 = vmatprep.subr.mxu0 0.0
    %184 = vmatpush1.msra.mxu0 %v127
    %185 = vmatprep.subr.mxu0 0.0
    %186 = vmatpush1.msra.mxu0 %v128
    %187 = vmatprep.subr.mxu0 0.0
    %188 = vmatpush1.msra.mxu0 %v129
    %189 = vmatprep.subr.mxu0 0.0
    %190 = vmatpush1.msra.mxu0 %v130
    %191 = vmatprep.subr.mxu0 0.0
    %192 = vmatpush1.msra.mxu0 %v131
    %193 = vmatprep.subr.mxu0 0.0
    %194 = vmatpush1.msra.mxu0 %v132
    %195 = vmatprep.subr.mxu0 0.0
    %196 = vmatpush1.msra.mxu0 %v133
    %197 = vmatprep.subr.mxu0 0.0
    %198 = vmatpush1.msra.mxu0 %v134
    %199 = vmatprep.subr.mxu0 0.0
    %200 = vmatpush1.msra.mxu0 %v135
    %201 = vmatprep.subr.mxu0 0.0
    %202 = vmatpush1.msra.mxu0 %v136
    %203 = vmatprep.subr.mxu0 0.0
    %204 = vmatpush1.msra.mxu0 %v137
    %205 = vmatprep.subr.mxu0 0.0
    %206 = vmatpush1.msra.mxu0 %v138
    %207 = vmatprep.subr.mxu0 0.0
    %208 = vmatpush1.msra.mxu0 %v139
    %209 = vmatprep.subr.mxu0 0.0
    %210 = vmatpush1.msra.mxu0 %v140
    %211 = vmatprep.subr.mxu0 0.0
    %212 = vmatpush1.msra.mxu0 %v141
    %213 = vmatprep.subr.mxu0 0.0
    %214 = vmatpush1.msra.mxu0 %v142
    %215 = vmatprep.subr.mxu0 0.0
    %216 = vmatpush1.msra.mxu0 %v143
    %217 = vmatprep.subr.mxu0 0.0
    %218 = vmatpush1.msra.mxu0 %v144
    %219 = vmatprep.subr.mxu0 0.0
    %220 = vmatpush1.msra.mxu0 %v145
    %221 = vmatprep.subr.mxu0 0.0
    %222 = vmatpush1.msra.mxu0 %v146
    %223 = vmatprep.subr.mxu0 0.0
    %224 = vmatpush1.msra.mxu0 %v147
    %225 = vmatprep.subr.mxu0 0.0
    %226 = vmatpush1.msra.mxu0 %v148
    %227 = vmatprep.subr.mxu0 0.0
    %228 = vmatpush1.msra.mxu0 %v149
    %229 = vmatprep.subr.mxu0 0.0
    %230 = vmatpush1.msra.mxu0 %v150
    %231 = vmatprep.mubr.f32.mxu0 %v75
    %232 = vmatmul.mubr.f32.gmra.mrb[0].mxu0 %v97
    %v233 = vpop.f32.mrb[0].mxu0
    %v234 = vadd.f32 0.0, %v233
    %v235 = vpop.f32.mrb[0].mxu0
    %236 = vmatprep.mubr.f32.mxu0 %v76
    %237 = vmatmul.mubr.f32.gmra.mrb[0].mxu0 %v98
    %v238 = vpop.f32.mrb[0].mxu0
    %v239 = vadd.f32 0.0, %v238
    %v240 = vpop.f32.mrb[0].mxu0
    %241 = vmatprep.mubr.f32.mxu0 %v77
    %242 = vmatmul.mubr.f32.gmra.mrb[0].mxu0 %v99
    %v243 = vpop.f32.mrb[0].mxu0
    %v244 = vadd.f32 0.0, %v243
    %v245 = vpop.f32.mrb[0].mxu0
    %246 = vmatprep.mubr.f32.mxu0 %v78
    %247 = vmatmul.mubr.f32.gmra.mrb[0].mxu0 %v100
    %v248 = vpop.f32.mrb[0].mxu0
    %v249 = vadd.f32 0.0, %v248
    %v250 = vpop.f32.mrb[0].mxu0
    %251 = vdwg.mxu0
    %252 = vmatprep.subr.mxu0 0.0
    %253 = vmatpush1.msra.mxu0 %v151
    %254 = vmatprep.subr.mxu0 0.0
    %255 = vmatpush1.msra.mxu0 %v152
    %256 = vmatprep.subr.mxu0 0.0
    %257 = vmatpush1.msra.mxu0 %v153
    %258 = vmatprep.subr.mxu0 0.0
    %259 = vmatpush1.msra.mxu0 %v154
    %260 = vmatprep.subr.mxu0 0.0
    %261 = vmatpush1.msra.mxu0 %v155
    %262 = vmatprep.subr.mxu0 0.0
    %263 = vmatpush1.msra.mxu0 %v156
    %264 = vmatprep.subr.mxu0 0.0
    %265 = vmatpush1.msra.mxu0 %v157
    %266 = vmatprep.subr.mxu0 0.0
    %267 = vmatpush1.msra.mxu0 %v158
    %268 = vmatprep.subr.mxu0 0.0
    %269 = vmatpush1.msra.mxu0 %v159
    %270 = vmatprep.subr.mxu0 0.0
    %271 = vmatpush1.msra.mxu0 %v160
    %272 = vmatprep.subr.mxu0 0.0
    %273 = vmatpush1.msra.mxu0 %v161
    %274 = vmatprep.subr.mxu0 0.0
    %275 = vmatpush1.msra.mxu0 %v162
    %276 = vmatprep.subr.mxu0 0.0
    %277 = vmatpush1.msra.mxu0 %v163
    %278 = vmatprep.subr.mxu0 0.0
    %279 = vmatpush1.msra.mxu0 %v164
    %280 = vmatprep.subr.mxu0 0.0
    %281 = vmatpush1.msra.mxu0 %v165
    %282 = vmatprep.subr.mxu0 0.0
    %283 = vmatpush1.msra.mxu0 %v166
    %284 = vmatprep.subr.mxu0 0.0
    %285 = vmatpush1.msra.mxu0 0.0
    %286 = vmatprep.subr.mxu0 0.0
    %287 = vmatpush1.msra.mxu0 0.0
    %288 = vmatprep.subr.mxu0 0.0
    %289 = vmatpush1.msra.mxu0 0.0
    %290 = vmatprep.subr.mxu0 0.0
    %291 = vmatpush1.msra.mxu0 0.0
    %292 = vmatprep.subr.mxu0 0.0
    %293 = vmatpush1.msra.mxu0 0.0
    %294 = vmatprep.subr.mxu0 0.0
    %295 = vmatpush1.msra.mxu0 0.0
    %296 = vmatprep.subr.mxu0 0.0
    %297 = vmatpush1.msra.mxu0 0.0
    %298 = vmatprep.subr.mxu0 0.0
    %299 = vmatpush1.msra.mxu0 0.0
    %300 = vmatprep.subr.mxu0 0.0
    %301 = vmatpush1.msra.mxu0 0.0
    %302 = vmatprep.subr.mxu0 0.0
    %303 = vmatpush1.msra.mxu0 0.0
    %304 = vmatprep.subr.mxu0 0.0
    %305 = vmatpush1.msra.mxu0 0.0
    %306 = vmatprep.subr.mxu0 0.0
    %307 = vmatpush1.msra.mxu0 0.0
    %308 = vmatprep.subr.mxu0 0.0
    %309 = vmatpush1.msra.mxu0 0.0
    %310 = vmatprep.subr.mxu0 0.0
    %311 = vmatpush1.msra.mxu0 0.0
    %312 = vmatprep.subr.mxu0 0.0
    %313 = vmatpush1.msra.mxu0 0.0
    %314 = vmatprep.subr.mxu0 0.0
    %315 = vmatpush1.msra.mxu0 0.0
    %316 = vmatprep.mubr.f32.mxu0 0.0
    %317 = vmatmul.mubr.f32.gmra.mrb[0].mxu0 %v115
    %v318 = vpop.f32.mrb[0].mxu0
    %v319 = vadd.f32 %v234, %v318
    %v320 = vpop.f32.mrb[0].mxu0
    %321 = vmatprep.mubr.f32.mxu0 0.0
    %322 = vmatmul.mubr.f32.gmra.mrb[0].mxu0 %v116
    %v323 = vpop.f32.mrb[0].mxu0
    %v324 = vadd.f32 %v239, %v323
    %v325 = vpop.f32.mrb[0].mxu0
    %326 = vmatprep.mubr.f32.mxu0 0.0
    %327 = vmatmul.mubr.f32.gmra.mrb[0].mxu0 %v117
    %v328 = vpop.f32.mrb[0].mxu0
    %v329 = vadd.f32 %v244, %v328
    %v330 = vpop.f32.mrb[0].mxu0
    %331 = vmatprep.mubr.f32.mxu0 0.0
    %332 = vmatmul.mubr.f32.gmra.mrb[0].mxu0 %v118
    %v333 = vpop.f32.mrb[0].mxu0
    %v334 = vadd.f32 %v249, %v333
    %v335 = vpop.f32.mrb[0].mxu0
    %336 = vdwg.mxu0
    %v337 = vadd.f32 %v319, %v324
    %v338 = vadd.f32 %v337, %v329
    %v339 = vadd.f32 %v338, %v334
    %v340 = vrot.slane %v339, 4
    %v341 = vadd.f32 %v339, %v340
    %v342 = vrot.slane %v341, 2
    %v343 = vadd.f32 %v341, %v342
    %v344 = vrot.slane %v343, 1
    %v345 = vadd.f32 %v343, %v344
    %v346 = vmul.f32 %v319, %v319
    %v347 = vmul.f32 %v324, %v324
    %v348 = vmul.f32 %v329, %v329
    %v349 = vmul.f32 %v334, %v334
    %v350 = vadd.f32 %v346, %v347
    %v351 = vadd.f32 %v350, %v348
    %v352 = vadd.f32 %v351, %v349
    %v353 = vrot.slane %v352, 4
    %v354 = vadd.f32 %v352, %v353
    %v355 = vrot.slane %v354, 2
    %v356 = vadd.f32 %v354, %v355
    %v357 = vrot.slane %v356, 1
    %v358 = vadd.f32 %v356, %v357
    %v359 = vsel %vm85, %v345, %v358
    %v360 = vld [vmem:[%s4] sm:$0xff]
    %v361 = vld [vmem:[%s4 + $0x8] sm:$0xff]
    %v362 = vld [vmem:[%s4 + $0x10] sm:$0xff]
    %v363 = vld [vmem:[%s4 + $0x18] sm:$0xff]
    %v364 = vld [vmem:[%s4 + $0x20] sm:$0xff]
    %v365 = vld [vmem:[%s4 + $0x28] sm:$0xff]
    %v366 = vld [vmem:[%s4 + $0x30] sm:$0xff]
    %v367 = vld [vmem:[%s4 + $0x38] sm:$0xff]
    %v368 = vld [vmem:[%s4 + $0x40] sm:$0xff]
    %v369 = vld [vmem:[%s4 + $0x48] sm:$0xff]
    %v370 = vld [vmem:[%s4 + $0x50] sm:$0xff]
    %v371 = vld [vmem:[%s4 + $0x58] sm:$0xff]
    %v372 = vld [vmem:[%s4 + $0x60] sm:$0xff]
    %v373 = vld [vmem:[%s4 + $0x68] sm:$0xff]
    %v374 = vld [vmem:[%s4 + $0x70] sm:$0xff]
    %v375 = vld [vmem:[%s4 + $0x78] sm:$0xff]
    %376 = vmatprep.subr.mxu0 0.0
    %377 = vmatpush1.msra.mxu0 %v360
    %378 = vmatprep.subr.mxu0 0.0
    %379 = vmatpush1.msra.mxu0 %v361
    %380 = vmatprep.subr.mxu0 0.0
    %381 = vmatpush1.msra.mxu0 %v362
    %382 = vmatprep.subr.mxu0 0.0
    %383 = vmatpush1.msra.mxu0 %v363
    %384 = vmatprep.subr.mxu0 0.0
    %385 = vmatpush1.msra.mxu0 %v364
    %386 = vmatprep.subr.mxu0 0.0
    %387 = vmatpush1.msra.mxu0 %v365
    %388 = vmatprep.subr.mxu0 0.0
    %389 = vmatpush1.msra.mxu0 %v366
    %390 = vmatprep.subr.mxu0 0.0
    %391 = vmatpush1.msra.mxu0 %v367
    %392 = vmatprep.subr.mxu0 0.0
    %393 = vmatpush1.msra.mxu0 %v368
    %394 = vmatprep.subr.mxu0 0.0
    %395 = vmatpush1.msra.mxu0 %v369
    %396 = vmatprep.subr.mxu0 0.0
    %397 = vmatpush1.msra.mxu0 %v370
    %398 = vmatprep.subr.mxu0 0.0
    %399 = vmatpush1.msra.mxu0 %v371
    %400 = vmatprep.subr.mxu0 0.0
    %401 = vmatpush1.msra.mxu0 %v372
    %402 = vmatprep.subr.mxu0 0.0
    %403 = vmatpush1.msra.mxu0 %v373
    %404 = vmatprep.subr.mxu0 0.0
    %405 = vmatpush1.msra.mxu0 %v374
    %406 = vmatprep.subr.mxu0 0.0
    %407 = vmatpush1.msra.mxu0 %v375
    %408 = vmatprep.subr.mxu0 0.0
    %409 = vmatpush1.msra.mxu0 0.0
    %410 = vmatprep.subr.mxu0 0.0
    %411 = vmatpush1.msra.mxu0 0.0
    %412 = vmatprep.subr.mxu0 0.0
    %413 = vmatpush1.msra.mxu0 0.0
    %414 = vmatprep.subr.mxu0 0.0
    %415 = vmatpush1.msra.mxu0 0.0
    %416 = vmatprep.subr.mxu0 0.0
    %417 = vmatpush1.msra.mxu0 0.0
    %418 = vmatprep.subr.mxu0 0.0
    %419 = vmatpush1.msra.mxu0 0.0
    %420 = vmatprep.subr.mxu0 0.0
    %421 = vmatpush1.msra.mxu0 0.0
    %422 = vmatprep.subr.mxu0 0.0
    %423 = vmatpush1.msra.mxu0 0.0
    %424 = vmatprep.subr.mxu0 0.0
    %425 = vmatpush1.msra.mxu0 0.0
    %426 = vmatprep.subr.mxu0 0.0
    %427 = vmatpush1.msra.mxu0 0.0
    %428 = vmatprep.subr.mxu0 0.0
    %429 = vmatpush1.msra.mxu0 0.0
    %430 = vmatprep.subr.mxu0 0.0
    %431 = vmatpush1.msra.mxu0 0.0
    %432 = vmatprep.subr.mxu0 0.0
    %433 = vmatpush1.msra.mxu0 0.0
    %434 = vmatprep.subr.mxu0 0.0
    %435 = vmatpush1.msra.mxu0 0.0
    %436 = vmatprep.subr.mxu0 0.0
    %437 = vmatpush1.msra.mxu0 0.0
    %438 = vmatprep.subr.mxu0 0.0
    %439 = vmatpush1.msra.mxu0 0.0
    %440 = vmatprep.mubr.f32.mxu0 0.0
    %441 = vmatmul.mubr.f32.gmra.mrb[0].mxu0 %v359
    %v442 = vpop.f32.mrb[0].mxu0
    %v443 = vadd.f32 0.0, %v442
    %v444 = vpop.f32.mrb[0].mxu0
    %445 = vdwg.mxu0
    %v446 = vmul.f32 %v443, 0.001953125
    %v447 = vmul.f32 %v446, %v446
    %v449 = vrot.slane %v447, 7
    %v451 = vsub.f32 %v446, %v449
    %v452 = vmax.f32 %v451, 0.0
    %v453 = vld [vmem:[%s8] sm:$0x1]
    %v454 = vadd.f32 %v452, 1e-05
    %v455 = vrsqrt.pop %v454
    %v458 = vunpack.c.l.s4 1966171168
    %v459 = vunpack.c.0.s8 %v458
    %v460 = vlaneseq
    %v461 = vshrl.u32 %v460, 7
    %v462 = vsub.s32 %v459, %v461
    %v463 = vrot.slane %v455, %v462
    %v464 = vcombine.high %v463, %v463
    %v466 = vunpack.c.l.s4 1966171168
    %v467 = vunpack.c.0.s8 %v466
    %v468 = vlaneseq
    %v469 = vshrl.u32 %v468, 7
    %v470 = vsub.s32 %v467, %v469
    %v471 = vrot.slane %v464, %v470
    %v473 = vmul.f32 %v453, %v471
    %v474 = vld [vmem:[%s9] sm:$0x1]
    %v475 = vmul.f32 %v446, %v473
    %v476 = vsub.f32 %v474, %v475
    %v478 = vlaneseq
    %v479 = vshrl.u32 %v478, 7
    %v480 = vsub.s32 0, %v479
    %v481 = vrot.slane %v476, %v480
    %v483 = vsel %vm85, %v473, %v481
    %v484 = vld [vmem:[%s5] sm:$0xff]
    %vm485 = vcmask 64512
    %v487 = vsel %vm485, %v483, 0
    %489 = vmatprep.subr.mxu0 0.0
    %490 = vmatpush1.msra.mxu0 %v484
    %491 = vmatprep.subr.mxu0 0.0
    %492 = vmatpush1.msra.mxu0 0.0
    %493 = vmatprep.subr.mxu0 0.0
    %494 = vmatpush1.msra.mxu0 0.0
    %495 = vmatprep.subr.mxu0 0.0
    %496 = vmatpush1.msra.mxu0 0.0
    %497 = vmatprep.subr.mxu0 0.0
    %498 = vmatpush1.msra.mxu0 0.0
    %499 = vmatprep.subr.mxu0 0.0
    %500 = vmatpush1.msra.mxu0 0.0
    %501 = vmatprep.subr.mxu0 0.0
    %502 = vmatpush1.msra.mxu0 0.0
    %503 = vmatprep.subr.mxu0 0.0
    %504 = vmatpush1.msra.mxu0 0.0
    %505 = vmatprep.subr.mxu0 0.0
    %506 = vmatpush1.msra.mxu0 0.0
    %507 = vmatprep.subr.mxu0 0.0
    %508 = vmatpush1.msra.mxu0 0.0
    %509 = vmatprep.subr.mxu0 0.0
    %510 = vmatpush1.msra.mxu0 0.0
    %511 = vmatprep.subr.mxu0 0.0
    %512 = vmatpush1.msra.mxu0 0.0
    %513 = vmatprep.subr.mxu0 0.0
    %514 = vmatpush1.msra.mxu0 0.0
    %515 = vmatprep.subr.mxu0 0.0
    %516 = vmatpush1.msra.mxu0 0.0
    %517 = vmatprep.subr.mxu0 0.0
    %518 = vmatpush1.msra.mxu0 0.0
    %519 = vmatprep.subr.mxu0 0.0
    %520 = vmatpush1.msra.mxu0 0.0
    %521 = vmatprep.subr.mxu0 0.0
    %522 = vmatpush1.msra.mxu0 0.0
    %523 = vmatprep.subr.mxu0 0.0
    %524 = vmatpush1.msra.mxu0 0.0
    %525 = vmatprep.subr.mxu0 0.0
    %526 = vmatpush1.msra.mxu0 0.0
    %527 = vmatprep.subr.mxu0 0.0
    %528 = vmatpush1.msra.mxu0 0.0
    %529 = vmatprep.subr.mxu0 0.0
    %530 = vmatpush1.msra.mxu0 0.0
    %531 = vmatprep.subr.mxu0 0.0
    %532 = vmatpush1.msra.mxu0 0.0
    %533 = vmatprep.subr.mxu0 0.0
    %534 = vmatpush1.msra.mxu0 0.0
    %535 = vmatprep.subr.mxu0 0.0
    %536 = vmatpush1.msra.mxu0 0.0
    %537 = vmatprep.subr.mxu0 0.0
    %538 = vmatpush1.msra.mxu0 0.0
    %539 = vmatprep.subr.mxu0 0.0
    %540 = vmatpush1.msra.mxu0 0.0
    %541 = vmatprep.subr.mxu0 0.0
    %542 = vmatpush1.msra.mxu0 0.0
    %543 = vmatprep.subr.mxu0 0.0
    %544 = vmatpush1.msra.mxu0 0.0
    %545 = vmatprep.subr.mxu0 0.0
    %546 = vmatpush1.msra.mxu0 0.0
    %547 = vmatprep.subr.mxu0 0.0
    %548 = vmatpush1.msra.mxu0 0.0
    %549 = vmatprep.subr.mxu0 0.0
    %550 = vmatpush1.msra.mxu0 0.0
    %551 = vmatprep.subr.mxu0 0.0
    %552 = vmatpush1.msra.mxu0 0.0
    %553 = vmatprep.mubr.f32.mxu0 0.0
    %554 = vmatmul.mubr.f32.gmra.mrb[0].mxu0 %v487
    %v555 = vpop.f32.mrb[0].mxu0
    %v556 = vadd.f32 0.0, %v555
    %v557 = vpop.f32.mrb[0].mxu0
    %558 = vdwg.mxu0
    %v559 = vlaneseq
    %v560 = vshrl.u32 %v559, 7
    %v561 = vsub.s32 0, %v560
    %v562 = vrot.slane %v556, %v561
    %v563 = vmul.f32 %v319, %v562
    %v564 = vmul.f32 %v324, %v562
    %v565 = vmul.f32 %v329, %v562
    %v566 = vmul.f32 %v334, %v562
    %v567 = vlaneseq
    %v568 = vshrl.u32 %v567, 7
    %v569 = vsub.s32 1, %v568
    %v570 = vrot.slane %v556, %v569
    %v571 = vadd.f32 %v563, %v570
    %v572 = vadd.f32 %v564, %v570
    %v573 = vadd.f32 %v565, %v570
    %v574 = vadd.f32 %v566, %v570
    %v575 = vmax.f32 %v571, 0.0
    %v576 = vmax.f32 %v572, 0.0
    %v577 = vmax.f32 %v573, 0.0
    %v578 = vmax.f32 %v574, 0.0
    %v580 = vrot.slane %v578, 7
    %v585 = vrot.slane %v575, 7
    %v586 = vrot.slane %v576, 7
    %v587 = vsel %vm85, %v585, %v586
    %v588 = vrot.slane %v577, 7
    %v589 = vsel %vm85, %v586, %v588
    %v590 = vsel %vm85, %v588, %v580
    %v595 = vsel %vm85, %v580, %v585
    %v596 = vmul.f32 %v67, %v595
    %v597 = vmul.f32 %v68, %v587
    %v598 = vmul.f32 %v69, %v589
    %v599 = vmul.f32 %v70, %v590
    %v600 = vrot.slane %v575, 1
    %v601 = vrot.slane %v576, 1
    %v602 = vsel %vm101, %v600, %v601
    %v603 = vrot.slane %v577, 1
    %v604 = vsel %vm101, %v601, %v603
    %v605 = vrot.slane %v578, 1
    %v606 = vsel %vm101, %v603, %v605
    %v612 = vsel %vm101, %v605, %v600
    %v613 = vmul.f32 %v71, %v602
    %v614 = vmul.f32 %v72, %v604
    %v615 = vmul.f32 %v73, %v606
    %v616 = vmul.f32 %v74, %v612
    %v617 = vld [vmem:[%s2] sm:$0xff]
    %v618 = vld [vmem:[%s2 + $0x8] sm:$0xff]
    %v619 = vld [vmem:[%s2 + $0x10] sm:$0xff]
    %v620 = vld [vmem:[%s2 + $0x18] sm:$0xff]
    %v621 = vld [vmem:[%s2 + $0x20] sm:$0xff]
    %v622 = vld [vmem:[%s2 + $0x28] sm:$0xff]
    %v623 = vld [vmem:[%s2 + $0x30] sm:$0xff]
    %v624 = vld [vmem:[%s2 + $0x38] sm:$0xff]
    %v625 = vld [vmem:[%s2 + $0x40] sm:$0xff]
    %v626 = vld [vmem:[%s2 + $0x48] sm:$0xff]
    %v627 = vld [vmem:[%s2 + $0x50] sm:$0xff]
    %v628 = vld [vmem:[%s2 + $0x58] sm:$0xff]
    %v629 = vld [vmem:[%s2 + $0x60] sm:$0xff]
    %v630 = vld [vmem:[%s2 + $0x68] sm:$0xff]
    %v631 = vld [vmem:[%s2 + $0x70] sm:$0xff]
    %v632 = vld [vmem:[%s2 + $0x78] sm:$0xff]
    %v633 = vld [vmem:[%s2 + $0x80] sm:$0xff]
    %v634 = vld [vmem:[%s2 + $0x88] sm:$0xff]
    %v635 = vld [vmem:[%s2 + $0x90] sm:$0xff]
    %v636 = vld [vmem:[%s2 + $0x98] sm:$0xff]
    %v637 = vld [vmem:[%s2 + $0xa0] sm:$0xff]
    %v638 = vld [vmem:[%s2 + $0xa8] sm:$0xff]
    %v639 = vld [vmem:[%s2 + $0xb0] sm:$0xff]
    %v640 = vld [vmem:[%s2 + $0xb8] sm:$0xff]
    %v641 = vld [vmem:[%s2 + $0xc0] sm:$0xff]
    %v642 = vld [vmem:[%s2 + $0xc8] sm:$0xff]
    %v643 = vld [vmem:[%s2 + $0xd0] sm:$0xff]
    %v644 = vld [vmem:[%s2 + $0xd8] sm:$0xff]
    %v645 = vld [vmem:[%s2 + $0xe0] sm:$0xff]
    %v646 = vld [vmem:[%s2 + $0xe8] sm:$0xff]
    %v647 = vld [vmem:[%s2 + $0xf0] sm:$0xff]
    %v648 = vld [vmem:[%s2 + $0xf8] sm:$0xff]
    %v649 = vld [vmem:[%s2 + $0x100] sm:$0xff]
    %v650 = vld [vmem:[%s2 + $0x108] sm:$0xff]
    %v651 = vld [vmem:[%s2 + $0x110] sm:$0xff]
    %v652 = vld [vmem:[%s2 + $0x118] sm:$0xff]
    %v653 = vld [vmem:[%s2 + $0x120] sm:$0xff]
    %v654 = vld [vmem:[%s2 + $0x128] sm:$0xff]
    %v655 = vld [vmem:[%s2 + $0x130] sm:$0xff]
    %v656 = vld [vmem:[%s2 + $0x138] sm:$0xff]
    %v657 = vld [vmem:[%s2 + $0x140] sm:$0xff]
    %v658 = vld [vmem:[%s2 + $0x148] sm:$0xff]
    %v659 = vld [vmem:[%s2 + $0x150] sm:$0xff]
    %v660 = vld [vmem:[%s2 + $0x158] sm:$0xff]
    %v661 = vld [vmem:[%s2 + $0x160] sm:$0xff]
    %v662 = vld [vmem:[%s2 + $0x168] sm:$0xff]
    %v663 = vld [vmem:[%s2 + $0x170] sm:$0xff]
    %v664 = vld [vmem:[%s2 + $0x178] sm:$0xff]
    %665 = vmatprep.subr.mxu0 0.0
    %666 = vmatpush1.msra.mxu0 %v617
    %667 = vmatprep.subr.mxu0 0.0
    %668 = vmatpush1.msra.mxu0 %v618
    %669 = vmatprep.subr.mxu0 0.0
    %670 = vmatpush1.msra.mxu0 %v619
    %671 = vmatprep.subr.mxu0 0.0
    %672 = vmatpush1.msra.mxu0 %v620
    %673 = vmatprep.subr.mxu0 0.0
    %674 = vmatpush1.msra.mxu0 %v621
    %675 = vmatprep.subr.mxu0 0.0
    %676 = vmatpush1.msra.mxu0 %v622
    %677 = vmatprep.subr.mxu0 0.0
    %678 = vmatpush1.msra.mxu0 %v623
    %679 = vmatprep.subr.mxu0 0.0
    %680 = vmatpush1.msra.mxu0 %v624
    %681 = vmatprep.subr.mxu0 0.0
    %682 = vmatpush1.msra.mxu0 %v625
    %683 = vmatprep.subr.mxu0 0.0
    %684 = vmatpush1.msra.mxu0 %v626
    %685 = vmatprep.subr.mxu0 0.0
    %686 = vmatpush1.msra.mxu0 %v627
    %687 = vmatprep.subr.mxu0 0.0
    %688 = vmatpush1.msra.mxu0 %v628
    %689 = vmatprep.subr.mxu0 0.0
    %690 = vmatpush1.msra.mxu0 %v629
    %691 = vmatprep.subr.mxu0 0.0
    %692 = vmatpush1.msra.mxu0 %v630
    %693 = vmatprep.subr.mxu0 0.0
    %694 = vmatpush1.msra.mxu0 %v631
    %695 = vmatprep.subr.mxu0 0.0
    %696 = vmatpush1.msra.mxu0 %v632
    %697 = vmatprep.subr.mxu0 0.0
    %698 = vmatpush1.msra.mxu0 %v633
    %699 = vmatprep.subr.mxu0 0.0
    %700 = vmatpush1.msra.mxu0 %v634
    %701 = vmatprep.subr.mxu0 0.0
    %702 = vmatpush1.msra.mxu0 %v635
    %703 = vmatprep.subr.mxu0 0.0
    %704 = vmatpush1.msra.mxu0 %v636
    %705 = vmatprep.subr.mxu0 0.0
    %706 = vmatpush1.msra.mxu0 %v637
    %707 = vmatprep.subr.mxu0 0.0
    %708 = vmatpush1.msra.mxu0 %v638
    %709 = vmatprep.subr.mxu0 0.0
    %710 = vmatpush1.msra.mxu0 %v639
    %711 = vmatprep.subr.mxu0 0.0
    %712 = vmatpush1.msra.mxu0 %v640
    %713 = vmatprep.subr.mxu0 0.0
    %714 = vmatpush1.msra.mxu0 %v641
    %715 = vmatprep.subr.mxu0 0.0
    %716 = vmatpush1.msra.mxu0 %v642
    %717 = vmatprep.subr.mxu0 0.0
    %718 = vmatpush1.msra.mxu0 %v643
    %719 = vmatprep.subr.mxu0 0.0
    %720 = vmatpush1.msra.mxu0 %v644
    %721 = vmatprep.subr.mxu0 0.0
    %722 = vmatpush1.msra.mxu0 %v645
    %723 = vmatprep.subr.mxu0 0.0
    %724 = vmatpush1.msra.mxu0 %v646
    %725 = vmatprep.subr.mxu0 0.0
    %726 = vmatpush1.msra.mxu0 %v647
    %727 = vmatprep.subr.mxu0 0.0
    %728 = vmatpush1.msra.mxu0 %v648
    %729 = vmatprep.mubr.f32.mxu0 %v575
    %730 = vmatmul.mubr.f32.gmra.mrb[0].mxu0 %v596
    %v731 = vpop.f32.mrb[0].mxu0
    %v732 = vadd.f32 0.0, %v731
    %v733 = vpop.f32.mrb[0].mxu0
    %734 = vmatprep.mubr.f32.mxu0 %v576
    %735 = vmatmul.mubr.f32.gmra.mrb[0].mxu0 %v597
    %v736 = vpop.f32.mrb[0].mxu0
    %v737 = vadd.f32 0.0, %v736
    %v738 = vpop.f32.mrb[0].mxu0
    %739 = vmatprep.mubr.f32.mxu0 %v577
    %740 = vmatmul.mubr.f32.gmra.mrb[0].mxu0 %v598
    %v741 = vpop.f32.mrb[0].mxu0
    %v742 = vadd.f32 0.0, %v741
    %v743 = vpop.f32.mrb[0].mxu0
    %744 = vmatprep.mubr.f32.mxu0 %v578
    %745 = vmatmul.mubr.f32.gmra.mrb[0].mxu0 %v599
    %v746 = vpop.f32.mrb[0].mxu0
    %v747 = vadd.f32 0.0, %v746
    %v748 = vpop.f32.mrb[0].mxu0
    %749 = vdwg.mxu0
    %750 = vmatprep.subr.mxu0 0.0
    %751 = vmatpush1.msra.mxu0 %v649
    %752 = vmatprep.subr.mxu0 0.0
    %753 = vmatpush1.msra.mxu0 %v650
    %754 = vmatprep.subr.mxu0 0.0
    %755 = vmatpush1.msra.mxu0 %v651
    %756 = vmatprep.subr.mxu0 0.0
    %757 = vmatpush1.msra.mxu0 %v652
    %758 = vmatprep.subr.mxu0 0.0
    %759 = vmatpush1.msra.mxu0 %v653
    %760 = vmatprep.subr.mxu0 0.0
    %761 = vmatpush1.msra.mxu0 %v654
    %762 = vmatprep.subr.mxu0 0.0
    %763 = vmatpush1.msra.mxu0 %v655
    %764 = vmatprep.subr.mxu0 0.0
    %765 = vmatpush1.msra.mxu0 %v656
    %766 = vmatprep.subr.mxu0 0.0
    %767 = vmatpush1.msra.mxu0 %v657
    %768 = vmatprep.subr.mxu0 0.0
    %769 = vmatpush1.msra.mxu0 %v658
    %770 = vmatprep.subr.mxu0 0.0
    %771 = vmatpush1.msra.mxu0 %v659
    %772 = vmatprep.subr.mxu0 0.0
    %773 = vmatpush1.msra.mxu0 %v660
    %774 = vmatprep.subr.mxu0 0.0
    %775 = vmatpush1.msra.mxu0 %v661
    %776 = vmatprep.subr.mxu0 0.0
    %777 = vmatpush1.msra.mxu0 %v662
    %778 = vmatprep.subr.mxu0 0.0
    %779 = vmatpush1.msra.mxu0 %v663
    %780 = vmatprep.subr.mxu0 0.0
    %781 = vmatpush1.msra.mxu0 %v664
    %782 = vmatprep.subr.mxu0 0.0
    %783 = vmatpush1.msra.mxu0 0.0
    %784 = vmatprep.subr.mxu0 0.0
    %785 = vmatpush1.msra.mxu0 0.0
    %786 = vmatprep.subr.mxu0 0.0
    %787 = vmatpush1.msra.mxu0 0.0
    %788 = vmatprep.subr.mxu0 0.0
    %789 = vmatpush1.msra.mxu0 0.0
    %790 = vmatprep.subr.mxu0 0.0
    %791 = vmatpush1.msra.mxu0 0.0
    %792 = vmatprep.subr.mxu0 0.0
    %793 = vmatpush1.msra.mxu0 0.0
    %794 = vmatprep.subr.mxu0 0.0
    %795 = vmatpush1.msra.mxu0 0.0
    %796 = vmatprep.subr.mxu0 0.0
    %797 = vmatpush1.msra.mxu0 0.0
    %798 = vmatprep.subr.mxu0 0.0
    %799 = vmatpush1.msra.mxu0 0.0
    %800 = vmatprep.subr.mxu0 0.0
    %801 = vmatpush1.msra.mxu0 0.0
    %802 = vmatprep.subr.mxu0 0.0
    %803 = vmatpush1.msra.mxu0 0.0
    %804 = vmatprep.subr.mxu0 0.0
    %805 = vmatpush1.msra.mxu0 0.0
    %806 = vmatprep.subr.mxu0 0.0
    %807 = vmatpush1.msra.mxu0 0.0
    %808 = vmatprep.subr.mxu0 0.0
    %809 = vmatpush1.msra.mxu0 0.0
    %810 = vmatprep.subr.mxu0 0.0
    %811 = vmatpush1.msra.mxu0 0.0
    %812 = vmatprep.subr.mxu0 0.0
    %813 = vmatpush1.msra.mxu0 0.0
    %814 = vmatprep.mubr.f32.mxu0 0.0
    %815 = vmatmul.mubr.f32.gmra.mrb[0].mxu0 %v613
    %v816 = vpop.f32.mrb[0].mxu0
    %v817 = vadd.f32 %v732, %v816
    %v818 = vpop.f32.mrb[0].mxu0
    %819 = vmatprep.mubr.f32.mxu0 0.0
    %820 = vmatmul.mubr.f32.gmra.mrb[0].mxu0 %v614
    %v821 = vpop.f32.mrb[0].mxu0
    %v822 = vadd.f32 %v737, %v821
    %v823 = vpop.f32.mrb[0].mxu0
    %824 = vmatprep.mubr.f32.mxu0 0.0
    %825 = vmatmul.mubr.f32.gmra.mrb[0].mxu0 %v615
    %v826 = vpop.f32.mrb[0].mxu0
    %v827 = vadd.f32 %v742, %v826
    %v828 = vpop.f32.mrb[0].mxu0
    %829 = vmatprep.mubr.f32.mxu0 0.0
    %830 = vmatmul.mubr.f32.gmra.mrb[0].mxu0 %v616
    %v831 = vpop.f32.mrb[0].mxu0
    %v832 = vadd.f32 %v747, %v831
    %v833 = vpop.f32.mrb[0].mxu0
    %834 = vdwg.mxu0
    %v835 = vadd.f32 %v817, %v822
    %v836 = vadd.f32 %v835, %v827
    %v837 = vadd.f32 %v836, %v832
    %v838 = vrot.slane %v837, 4
    %v839 = vadd.f32 %v837, %v838
    %v840 = vrot.slane %v839, 2
    %v841 = vadd.f32 %v839, %v840
    %v842 = vrot.slane %v841, 1
    %v843 = vadd.f32 %v841, %v842
    %v844 = vmul.f32 %v817, %v817
    %v845 = vmul.f32 %v822, %v822
    %v846 = vmul.f32 %v827, %v827
    %v847 = vmul.f32 %v832, %v832
    %v848 = vadd.f32 %v844, %v845
    %v849 = vadd.f32 %v848, %v846
    %v850 = vadd.f32 %v849, %v847
    %v851 = vrot.slane %v850, 4
    %v852 = vadd.f32 %v850, %v851
    %v853 = vrot.slane %v852, 2
    %v854 = vadd.f32 %v852, %v853
    %v855 = vrot.slane %v854, 1
    %v856 = vadd.f32 %v854, %v855
    %v857 = vsel %vm85, %v843, %v856
    %858 = vmatprep.subr.mxu0 0.0
    %859 = vmatpush1.msra.mxu0 %v360
    %860 = vmatprep.subr.mxu0 0.0
    %861 = vmatpush1.msra.mxu0 %v361
    %862 = vmatprep.subr.mxu0 0.0
    %863 = vmatpush1.msra.mxu0 %v362
    %864 = vmatprep.subr.mxu0 0.0
    %865 = vmatpush1.msra.mxu0 %v363
    %866 = vmatprep.subr.mxu0 0.0
    %867 = vmatpush1.msra.mxu0 %v364
    %868 = vmatprep.subr.mxu0 0.0
    %869 = vmatpush1.msra.mxu0 %v365
    %870 = vmatprep.subr.mxu0 0.0
    %871 = vmatpush1.msra.mxu0 %v366
    %872 = vmatprep.subr.mxu0 0.0
    %873 = vmatpush1.msra.mxu0 %v367
    %874 = vmatprep.subr.mxu0 0.0
    %875 = vmatpush1.msra.mxu0 %v368
    %876 = vmatprep.subr.mxu0 0.0
    %877 = vmatpush1.msra.mxu0 %v369
    %878 = vmatprep.subr.mxu0 0.0
    %879 = vmatpush1.msra.mxu0 %v370
    %880 = vmatprep.subr.mxu0 0.0
    %881 = vmatpush1.msra.mxu0 %v371
    %882 = vmatprep.subr.mxu0 0.0
    %883 = vmatpush1.msra.mxu0 %v372
    %884 = vmatprep.subr.mxu0 0.0
    %885 = vmatpush1.msra.mxu0 %v373
    %886 = vmatprep.subr.mxu0 0.0
    %887 = vmatpush1.msra.mxu0 %v374
    %888 = vmatprep.subr.mxu0 0.0
    %889 = vmatpush1.msra.mxu0 %v375
    %890 = vmatprep.subr.mxu0 0.0
    %891 = vmatpush1.msra.mxu0 0.0
    %892 = vmatprep.subr.mxu0 0.0
    %893 = vmatpush1.msra.mxu0 0.0
    %894 = vmatprep.subr.mxu0 0.0
    %895 = vmatpush1.msra.mxu0 0.0
    %896 = vmatprep.subr.mxu0 0.0
    %897 = vmatpush1.msra.mxu0 0.0
    %898 = vmatprep.subr.mxu0 0.0
    %899 = vmatpush1.msra.mxu0 0.0
    %900 = vmatprep.subr.mxu0 0.0
    %901 = vmatpush1.msra.mxu0 0.0
    %902 = vmatprep.subr.mxu0 0.0
    %903 = vmatpush1.msra.mxu0 0.0
    %904 = vmatprep.subr.mxu0 0.0
    %905 = vmatpush1.msra.mxu0 0.0
    %906 = vmatprep.subr.mxu0 0.0
    %907 = vmatpush1.msra.mxu0 0.0
    %908 = vmatprep.subr.mxu0 0.0
    %909 = vmatpush1.msra.mxu0 0.0
    %910 = vmatprep.subr.mxu0 0.0
    %911 = vmatpush1.msra.mxu0 0.0
    %912 = vmatprep.subr.mxu0 0.0
    %913 = vmatpush1.msra.mxu0 0.0
    %914 = vmatprep.subr.mxu0 0.0
    %915 = vmatpush1.msra.mxu0 0.0
    %916 = vmatprep.subr.mxu0 0.0
    %917 = vmatpush1.msra.mxu0 0.0
    %918 = vmatprep.subr.mxu0 0.0
    %919 = vmatpush1.msra.mxu0 0.0
    %920 = vmatprep.subr.mxu0 0.0
    %921 = vmatpush1.msra.mxu0 0.0
    %922 = vmatprep.mubr.f32.mxu0 0.0
    %923 = vmatmul.mubr.f32.gmra.mrb[0].mxu0 %v857
    %v924 = vpop.f32.mrb[0].mxu0
    %v925 = vadd.f32 0.0, %v924
    %v926 = vpop.f32.mrb[0].mxu0
    %927 = vdwg.mxu0
    %v928 = vmul.f32 %v925, 0.001953125
    %v929 = vmul.f32 %v928, %v928
    %v931 = vrot.slane %v929, 7
    %v933 = vsub.f32 %v928, %v931
    %v934 = vmax.f32 %v933, 0.0
    %v935 = vld [vmem:[%s10] sm:$0x1]
    %v936 = vadd.f32 %v934, 1e-05
    %v937 = vrsqrt.pop %v936
    %v940 = vunpack.c.l.s4 1966171168
    %v941 = vunpack.c.0.s8 %v940
    %v942 = vlaneseq
    %v943 = vshrl.u32 %v942, 7
    %v944 = vsub.s32 %v941, %v943
    %v945 = vrot.slane %v937, %v944
    %v946 = vcombine.high %v945, %v945
    %v948 = vunpack.c.l.s4 1966171168
    %v949 = vunpack.c.0.s8 %v948
    %v950 = vlaneseq
    %v951 = vshrl.u32 %v950, 7
    %v952 = vsub.s32 %v949, %v951
    %v953 = vrot.slane %v946, %v952
    %v955 = vmul.f32 %v935, %v953
    %v956 = vld [vmem:[%s11] sm:$0x1]
    %v957 = vmul.f32 %v928, %v955
    %v958 = vsub.f32 %v956, %v957
    %v960 = vlaneseq
    %v961 = vshrl.u32 %v960, 7
    %v962 = vsub.s32 0, %v961
    %v963 = vrot.slane %v958, %v962
    %v965 = vsel %vm85, %v955, %v963
    %v967 = vsel %vm485, %v965, 0
    %969 = vmatprep.subr.mxu0 0.0
    %970 = vmatpush1.msra.mxu0 %v484
    %971 = vmatprep.subr.mxu0 0.0
    %972 = vmatpush1.msra.mxu0 0.0
    %973 = vmatprep.subr.mxu0 0.0
    %974 = vmatpush1.msra.mxu0 0.0
    %975 = vmatprep.subr.mxu0 0.0
    %976 = vmatpush1.msra.mxu0 0.0
    %977 = vmatprep.subr.mxu0 0.0
    %978 = vmatpush1.msra.mxu0 0.0
    %979 = vmatprep.subr.mxu0 0.0
    %980 = vmatpush1.msra.mxu0 0.0
    %981 = vmatprep.subr.mxu0 0.0
    %982 = vmatpush1.msra.mxu0 0.0
    %983 = vmatprep.subr.mxu0 0.0
    %984 = vmatpush1.msra.mxu0 0.0
    %985 = vmatprep.subr.mxu0 0.0
    %986 = vmatpush1.msra.mxu0 0.0
    %987 = vmatprep.subr.mxu0 0.0
    %988 = vmatpush1.msra.mxu0 0.0
    %989 = vmatprep.subr.mxu0 0.0
    %990 = vmatpush1.msra.mxu0 0.0
    %991 = vmatprep.subr.mxu0 0.0
    %992 = vmatpush1.msra.mxu0 0.0
    %993 = vmatprep.subr.mxu0 0.0
    %994 = vmatpush1.msra.mxu0 0.0
    %995 = vmatprep.subr.mxu0 0.0
    %996 = vmatpush1.msra.mxu0 0.0
    %997 = vmatprep.subr.mxu0 0.0
    %998 = vmatpush1.msra.mxu0 0.0
    %999 = vmatprep.subr.mxu0 0.0
    %1000 = vmatpush1.msra.mxu0 0.0
    %1001 = vmatprep.subr.mxu0 0.0
    %1002 = vmatpush1.msra.mxu0 0.0
    %1003 = vmatprep.subr.mxu0 0.0
    %1004 = vmatpush1.msra.mxu0 0.0
    %1005 = vmatprep.subr.mxu0 0.0
    %1006 = vmatpush1.msra.mxu0 0.0
    %1007 = vmatprep.subr.mxu0 0.0
    %1008 = vmatpush1.msra.mxu0 0.0
    %1009 = vmatprep.subr.mxu0 0.0
    %1010 = vmatpush1.msra.mxu0 0.0
    %1011 = vmatprep.subr.mxu0 0.0
    %1012 = vmatpush1.msra.mxu0 0.0
    %1013 = vmatprep.subr.mxu0 0.0
    %1014 = vmatpush1.msra.mxu0 0.0
    %1015 = vmatprep.subr.mxu0 0.0
    %1016 = vmatpush1.msra.mxu0 0.0
    %1017 = vmatprep.subr.mxu0 0.0
    %1018 = vmatpush1.msra.mxu0 0.0
    %1019 = vmatprep.subr.mxu0 0.0
    %1020 = vmatpush1.msra.mxu0 0.0
    %1021 = vmatprep.subr.mxu0 0.0
    %1022 = vmatpush1.msra.mxu0 0.0
    %1023 = vmatprep.subr.mxu0 0.0
    %1024 = vmatpush1.msra.mxu0 0.0
    %1025 = vmatprep.subr.mxu0 0.0
    %1026 = vmatpush1.msra.mxu0 0.0
    %1027 = vmatprep.subr.mxu0 0.0
    %1028 = vmatpush1.msra.mxu0 0.0
    %1029 = vmatprep.subr.mxu0 0.0
    %1030 = vmatpush1.msra.mxu0 0.0
    %1031 = vmatprep.subr.mxu0 0.0
    %1032 = vmatpush1.msra.mxu0 0.0
    %1033 = vmatprep.mubr.f32.mxu0 0.0
    %1034 = vmatmul.mubr.f32.gmra.mrb[0].mxu0 %v967
    %v1035 = vpop.f32.mrb[0].mxu0
    %v1036 = vadd.f32 0.0, %v1035
    %v1037 = vpop.f32.mrb[0].mxu0
    %1038 = vdwg.mxu0
    %v1039 = vlaneseq
    %v1040 = vshrl.u32 %v1039, 7
    %v1041 = vsub.s32 0, %v1040
    %v1042 = vrot.slane %v1036, %v1041
    %v1043 = vmul.f32 %v817, %v1042
    %v1044 = vmul.f32 %v822, %v1042
    %v1045 = vmul.f32 %v827, %v1042
    %v1046 = vmul.f32 %v832, %v1042
    %v1047 = vlaneseq
    %v1048 = vshrl.u32 %v1047, 7
    %v1049 = vsub.s32 1, %v1048
    %v1050 = vrot.slane %v1036, %v1049
    %v1051 = vadd.f32 %v1043, %v1050
    %v1052 = vadd.f32 %v1044, %v1050
    %v1053 = vadd.f32 %v1045, %v1050
    %v1054 = vadd.f32 %v1046, %v1050
    %v1055 = vmax.f32 %v1051, 0.0
    %v1056 = vmax.f32 %v1052, 0.0
    %v1057 = vmax.f32 %v1053, 0.0
    %v1058 = vmax.f32 %v1054, 0.0
    %v1059 = vld [vmem:[#allocation2] sm:$0xff]
    %v1060 = vld [vmem:[#allocation2 + $0x8] sm:$0xff]
    %v1061 = vld [vmem:[#allocation2 + $0x10] sm:$0xff]
    %v1062 = vld [vmem:[#allocation2 + $0x18] sm:$0xff]
    %v1063 = vld [vmem:[#allocation2 + $0x20] sm:$0xff]
    %v1064 = vld [vmem:[#allocation2 + $0x28] sm:$0xff]
    %v1065 = vld [vmem:[#allocation2 + $0x30] sm:$0xff]
    %v1066 = vld [vmem:[#allocation2 + $0x38] sm:$0xff]
    %v1067 = vld [vmem:[#allocation2 + $0x40] sm:$0xff]
    %v1068 = vld [vmem:[#allocation2 + $0x48] sm:$0xff]
    %v1069 = vld [vmem:[#allocation2 + $0x50] sm:$0xff]
    %v1070 = vld [vmem:[#allocation2 + $0x58] sm:$0xff]
    %v1071 = vld [vmem:[#allocation2 + $0x60] sm:$0xff]
    %v1072 = vld [vmem:[#allocation2 + $0x68] sm:$0xff]
    %v1073 = vld [vmem:[#allocation2 + $0x70] sm:$0xff]
    %v1074 = vld [vmem:[#allocation2 + $0x78] sm:$0xff]
    %v1075 = vld [vmem:[#allocation2 + $0x80] sm:$0xff]
    %v1076 = vld [vmem:[#allocation2 + $0x88] sm:$0xff]
    %v1077 = vld [vmem:[#allocation2 + $0x90] sm:$0xff]
    %v1078 = vld [vmem:[#allocation2 + $0x98] sm:$0xff]
    %v1079 = vld [vmem:[#allocation2 + $0xa0] sm:$0xff]
    %v1080 = vld [vmem:[#allocation2 + $0xa8] sm:$0xff]
    %v1081 = vld [vmem:[#allocation2 + $0xb0] sm:$0xff]
    %v1082 = vld [vmem:[#allocation2 + $0xb8] sm:$0xff]
    %v1083 = vld [vmem:[#allocation2 + $0xc0] sm:$0xff]
    %v1084 = vld [vmem:[#allocation2 + $0xc8] sm:$0xff]
    %v1085 = vld [vmem:[#allocation2 + $0xd0] sm:$0xff]
    %v1086 = vld [vmem:[#allocation2 + $0xd8] sm:$0xff]
    %v1087 = vld [vmem:[#allocation2 + $0xe0] sm:$0xff]
    %v1088 = vld [vmem:[#allocation2 + $0xe8] sm:$0xff]
    %v1089 = vld [vmem:[#allocation2 + $0xf0] sm:$0xff]
    %v1090 = vld [vmem:[#allocation2 + $0xf8] sm:$0xff]
    %v1091 = vld [vmem:[#allocation2 + $0x100] sm:$0xff]
    %v1092 = vld [vmem:[#allocation2 + $0x108] sm:$0xff]
    %v1093 = vld [vmem:[#allocation2 + $0x110] sm:$0xff]
    %v1094 = vld [vmem:[#allocation2 + $0x118] sm:$0xff]
    %v1095 = vld [vmem:[#allocation2 + $0x120] sm:$0xff]
    %v1096 = vld [vmem:[#allocation2 + $0x128] sm:$0xff]
    %v1097 = vld [vmem:[#allocation2 + $0x130] sm:$0xff]
    %v1098 = vld [vmem:[#allocation2 + $0x138] sm:$0xff]
    %v1099 = vld [vmem:[#allocation2 + $0x140] sm:$0xff]
    %v1100 = vld [vmem:[#allocation2 + $0x148] sm:$0xff]
    %v1101 = vld [vmem:[#allocation2 + $0x150] sm:$0xff]
    %v1102 = vld [vmem:[#allocation2 + $0x158] sm:$0xff]
    %v1103 = vld [vmem:[#allocation2 + $0x160] sm:$0xff]
    %v1104 = vld [vmem:[#allocation2 + $0x168] sm:$0xff]
    %v1105 = vld [vmem:[#allocation2 + $0x170] sm:$0xff]
    %v1106 = vld [vmem:[#allocation2 + $0x178] sm:$0xff]
    %1107 = vmatprep.subr.mxu0 %v1060
    %1108 = vmatpush1.msra.mxu0 %v1059
    %1109 = vmatprep.subr.mxu0 %v1063
    %1110 = vmatpush1.msra.mxu0 %v1062
    %1111 = vmatprep.subr.mxu0 %v1066
    %1112 = vmatpush1.msra.mxu0 %v1065
    %1113 = vmatprep.subr.mxu0 %v1069
    %1114 = vmatpush1.msra.mxu0 %v1068
    %1115 = vmatprep.subr.mxu0 %v1072
    %1116 = vmatpush1.msra.mxu0 %v1071
    %1117 = vmatprep.subr.mxu0 %v1075
    %1118 = vmatpush1.msra.mxu0 %v1074
    %1119 = vmatprep.subr.mxu0 %v1078
    %1120 = vmatpush1.msra.mxu0 %v1077
    %1121 = vmatprep.subr.mxu0 %v1081
    %1122 = vmatpush1.msra.mxu0 %v1080
    %1123 = vmatprep.subr.mxu0 %v1084
    %1124 = vmatpush1.msra.mxu0 %v1083
    %1125 = vmatprep.subr.mxu0 %v1087
    %1126 = vmatpush1.msra.mxu0 %v1086
    %1127 = vmatprep.subr.mxu0 %v1090
    %1128 = vmatpush1.msra.mxu0 %v1089
    %1129 = vmatprep.subr.mxu0 %v1093
    %1130 = vmatpush1.msra.mxu0 %v1092
    %1131 = vmatprep.subr.mxu0 %v1096
    %1132 = vmatpush1.msra.mxu0 %v1095
    %1133 = vmatprep.subr.mxu0 %v1099
    %1134 = vmatpush1.msra.mxu0 %v1098
    %1135 = vmatprep.subr.mxu0 %v1102
    %1136 = vmatpush1.msra.mxu0 %v1101
    %1137 = vmatprep.subr.mxu0 %v1105
    %1138 = vmatpush1.msra.mxu0 %v1104
    %1139 = vmatprep.subr.mxu0 0.0
    %1140 = vmatpush1.msra.mxu0 0.0
    %1141 = vmatprep.subr.mxu0 0.0
    %1142 = vmatpush1.msra.mxu0 0.0
    %1143 = vmatprep.subr.mxu0 0.0
    %1144 = vmatpush1.msra.mxu0 0.0
    %1145 = vmatprep.subr.mxu0 0.0
    %1146 = vmatpush1.msra.mxu0 0.0
    %1147 = vmatprep.subr.mxu0 0.0
    %1148 = vmatpush1.msra.mxu0 0.0
    %1149 = vmatprep.subr.mxu0 0.0
    %1150 = vmatpush1.msra.mxu0 0.0
    %1151 = vmatprep.subr.mxu0 0.0
    %1152 = vmatpush1.msra.mxu0 0.0
    %1153 = vmatprep.subr.mxu0 0.0
    %1154 = vmatpush1.msra.mxu0 0.0
    %1155 = vmatprep.subr.mxu0 0.0
    %1156 = vmatpush1.msra.mxu0 0.0
    %1157 = vmatprep.subr.mxu0 0.0
    %1158 = vmatpush1.msra.mxu0 0.0
    %1159 = vmatprep.subr.mxu0 0.0
    %1160 = vmatpush1.msra.mxu0 0.0
    %1161 = vmatprep.subr.mxu0 0.0
    %1162 = vmatpush1.msra.mxu0 0.0
    %1163 = vmatprep.subr.mxu0 0.0
    %1164 = vmatpush1.msra.mxu0 0.0
    %1165 = vmatprep.subr.mxu0 0.0
    %1166 = vmatpush1.msra.mxu0 0.0
    %1167 = vmatprep.subr.mxu0 0.0
    %1168 = vmatpush1.msra.mxu0 0.0
    %1169 = vmatprep.subr.mxu0 0.0
    %1170 = vmatpush1.msra.mxu0 0.0
    %1171 = vmatprep.mubr.f32.mxu0 0.0
    %1172 = vmatmul.mubr.f32.gmra.mrb[0].mxu0 %v1055
    %v1173 = vpop.f32.mrb[0].mxu0
    %v1174 = vadd.f32 0.0, %v1173
    %v1175 = vpop.f32.mrb[0].mxu0
    %v1176 = vadd.f32 0.0, %v1175
    %1177 = vmatprep.mubr.f32.mxu0 0.0
    %1178 = vmatmul.mubr.f32.gmra.mrb[0].mxu0 %v1056
    %v1179 = vpop.f32.mrb[0].mxu0
    %v1180 = vadd.f32 0.0, %v1179
    %v1181 = vpop.f32.mrb[0].mxu0
    %v1182 = vadd.f32 0.0, %v1181
    %1183 = vmatprep.mubr.f32.mxu0 0.0
    %1184 = vmatmul.mubr.f32.gmra.mrb[0].mxu0 %v1057
    %v1185 = vpop.f32.mrb[0].mxu0
    %v1186 = vadd.f32 0.0, %v1185
    %v1187 = vpop.f32.mrb[0].mxu0
    %v1188 = vadd.f32 0.0, %v1187
    %1189 = vmatprep.mubr.f32.mxu0 0.0
    %1190 = vmatmul.mubr.f32.gmra.mrb[0].mxu0 %v1058
    %v1191 = vpop.f32.mrb[0].mxu0
    %v1192 = vadd.f32 0.0, %v1191
    %v1193 = vpop.f32.mrb[0].mxu0
    %v1194 = vadd.f32 0.0, %v1193
    %1195 = vdwg.mxu0
    %1196 = vmatprep.subr.mxu0 0.0
    %1197 = vmatpush1.msra.mxu0 %v1061
    %1198 = vmatprep.subr.mxu0 0.0
    %1199 = vmatpush1.msra.mxu0 %v1064
    %1200 = vmatprep.subr.mxu0 0.0
    %1201 = vmatpush1.msra.mxu0 %v1067
    %1202 = vmatprep.subr.mxu0 0.0
    %1203 = vmatpush1.msra.mxu0 %v1070
    %1204 = vmatprep.subr.mxu0 0.0
    %1205 = vmatpush1.msra.mxu0 %v1073
    %1206 = vmatprep.subr.mxu0 0.0
    %1207 = vmatpush1.msra.mxu0 %v1076
    %1208 = vmatprep.subr.mxu0 0.0
    %1209 = vmatpush1.msra.mxu0 %v1079
    %1210 = vmatprep.subr.mxu0 0.0
    %1211 = vmatpush1.msra.mxu0 %v1082
    %1212 = vmatprep.subr.mxu0 0.0
    %1213 = vmatpush1.msra.mxu0 %v1085
    %1214 = vmatprep.subr.mxu0 0.0
    %1215 = vmatpush1.msra.mxu0 %v1088
    %1216 = vmatprep.subr.mxu0 0.0
    %1217 = vmatpush1.msra.mxu0 %v1091
    %1218 = vmatprep.subr.mxu0 0.0
    %1219 = vmatpush1.msra.mxu0 %v1094
    %1220 = vmatprep.subr.mxu0 0.0
    %1221 = vmatpush1.msra.mxu0 %v1097
    %1222 = vmatprep.subr.mxu0 0.0
    %1223 = vmatpush1.msra.mxu0 %v1100
    %1224 = vmatprep.subr.mxu0 0.0
    %1225 = vmatpush1.msra.mxu0 %v1103
    %1226 = vmatprep.subr.mxu0 0.0
    %1227 = vmatpush1.msra.mxu0 %v1106
    %1228 = vmatprep.subr.mxu0 0.0
    %1229 = vmatpush1.msra.mxu0 0.0
    %1230 = vmatprep.subr.mxu0 0.0
    %1231 = vmatpush1.msra.mxu0 0.0
    %1232 = vmatprep.subr.mxu0 0.0
    %1233 = vmatpush1.msra.mxu0 0.0
    %1234 = vmatprep.subr.mxu0 0.0
    %1235 = vmatpush1.msra.mxu0 0.0
    %1236 = vmatprep.subr.mxu0 0.0
    %1237 = vmatpush1.msra.mxu0 0.0
    %1238 = vmatprep.subr.mxu0 0.0
    %1239 = vmatpush1.msra.mxu0 0.0
    %1240 = vmatprep.subr.mxu0 0.0
    %1241 = vmatpush1.msra.mxu0 0.0
    %1242 = vmatprep.subr.mxu0 0.0
    %1243 = vmatpush1.msra.mxu0 0.0
    %1244 = vmatprep.subr.mxu0 0.0
    %1245 = vmatpush1.msra.mxu0 0.0
    %1246 = vmatprep.subr.mxu0 0.0
    %1247 = vmatpush1.msra.mxu0 0.0
    %1248 = vmatprep.subr.mxu0 0.0
    %1249 = vmatpush1.msra.mxu0 0.0
    %1250 = vmatprep.subr.mxu0 0.0
    %1251 = vmatpush1.msra.mxu0 0.0
    %1252 = vmatprep.subr.mxu0 0.0
    %1253 = vmatpush1.msra.mxu0 0.0
    %1254 = vmatprep.subr.mxu0 0.0
    %1255 = vmatpush1.msra.mxu0 0.0
    %1256 = vmatprep.subr.mxu0 0.0
    %1257 = vmatpush1.msra.mxu0 0.0
    %1258 = vmatprep.subr.mxu0 0.0
    %1259 = vmatpush1.msra.mxu0 0.0
    %1260 = vmatprep.mubr.f32.mxu0 0.0
    %1261 = vmatmul.mubr.f32.gmra.mrb[0].mxu0 %v1055
    %v1262 = vpop.f32.mrb[0].mxu0
    %v1263 = vadd.f32 0.0, %v1262
    %v1264 = vpop.f32.mrb[0].mxu0
    %1265 = vmatprep.mubr.f32.mxu0 0.0
    %1266 = vmatmul.mubr.f32.gmra.mrb[0].mxu0 %v1056
    %v1267 = vpop.f32.mrb[0].mxu0
    %v1268 = vadd.f32 0.0, %v1267
    %v1269 = vpop.f32.mrb[0].mxu0
    %1270 = vmatprep.mubr.f32.mxu0 0.0
    %1271 = vmatmul.mubr.f32.gmra.mrb[0].mxu0 %v1057
    %v1272 = vpop.f32.mrb[0].mxu0
    %v1273 = vadd.f32 0.0, %v1272
    %v1274 = vpop.f32.mrb[0].mxu0
    %1275 = vmatprep.mubr.f32.mxu0 0.0
    %1276 = vmatmul.mubr.f32.gmra.mrb[0].mxu0 %v1058
    %v1277 = vpop.f32.mrb[0].mxu0
    %v1278 = vadd.f32 0.0, %v1277
    %v1279 = vpop.f32.mrb[0].mxu0
    %1280 = vdwg.mxu0
    %v1285 = vrot.slane %v1263, 1
    %v1286 = vrot.slane %v1268, 1
    %v1287 = vsel %vm101, %v1285, %v1286
    %v1288 = vrot.slane %v1273, 1
    %v1289 = vsel %vm101, %v1286, %v1288
    %v1290 = vrot.slane %v1278, 1
    %v1291 = vsel %vm101, %v1288, %v1290
    %v1297 = vsel %vm101, %v1290, %v1285
    %v1298 = vmul.f32 %v71, %v1287
    %v1299 = vmul.f32 %v72, %v1289
    %v1300 = vmul.f32 %v73, %v1291
    %v1301 = vmul.f32 %v74, %v1297
    %v1302 = vadd.f32 %v1174, %v1298
    %v1303 = vadd.f32 %v1180, %v1299
    %v1304 = vadd.f32 %v1186, %v1300
    %v1305 = vadd.f32 %v1192, %v1301
    %v1306 = vadd.f32 %v1176, %v1182
    %v1307 = vadd.f32 %v1306, %v1188
    %v1308 = vadd.f32 %v1307, %v1194
    %v1309 = vrot.slane %v1308, 4
    %v1310 = vadd.f32 %v1308, %v1309
    %v1311 = vrot.slane %v1310, 2
    %v1312 = vadd.f32 %v1310, %v1311
    %v1313 = vrot.slane %v1312, 1
    %v1314 = vadd.f32 %v1312, %v1313
    %v1315 = vadd.f32 %v1302, %v1303
    %v1316 = vadd.f32 %v1315, %v1304
    %v1317 = vadd.f32 %v1316, %v1305
    %v1318 = vrot.slane %v1317, 4
    %v1319 = vadd.f32 %v1317, %v1318
    %v1320 = vrot.slane %v1319, 2
    %v1321 = vadd.f32 %v1319, %v1320
    %v1322 = vrot.slane %v1321, 1
    %v1323 = vadd.f32 %v1321, %v1322
    %v1324 = vadd.f32 %v1314, %v1323
    %v1325 = vmul.f32 %v1176, %v1176
    %v1326 = vmul.f32 %v1182, %v1182
    %v1327 = vmul.f32 %v1188, %v1188
    %v1328 = vmul.f32 %v1194, %v1194
    %v1329 = vadd.f32 %v1325, %v1326
    %v1330 = vadd.f32 %v1329, %v1327
    %v1331 = vadd.f32 %v1330, %v1328
    %v1332 = vrot.slane %v1331, 4
    %v1333 = vadd.f32 %v1331, %v1332
    %v1334 = vrot.slane %v1333, 2
    %v1335 = vadd.f32 %v1333, %v1334
    %v1336 = vrot.slane %v1335, 1
    %v1337 = vadd.f32 %v1335, %v1336
    %v1338 = vmul.f32 %v1302, %v1302
    %v1339 = vmul.f32 %v1303, %v1303
    %v1340 = vmul.f32 %v1304, %v1304
    %v1341 = vmul.f32 %v1305, %v1305
    %v1342 = vadd.f32 %v1338, %v1339
    %v1343 = vadd.f32 %v1342, %v1340
    %v1344 = vadd.f32 %v1343, %v1341
    %v1345 = vrot.slane %v1344, 4
    %v1346 = vadd.f32 %v1344, %v1345
    %v1347 = vrot.slane %v1346, 2
    %v1348 = vadd.f32 %v1346, %v1347
    %v1349 = vrot.slane %v1348, 1
    %v1350 = vadd.f32 %v1348, %v1349
    %v1351 = vadd.f32 %v1337, %v1350
    %v1352 = vsel %vm85, %v1324, %v1351
    %v1353 = vld [vmem:[%s6] sm:$0xff]
    %v1354 = vld [vmem:[%s6 + $0x8] sm:$0xff]
    %v1355 = vld [vmem:[%s6 + $0x10] sm:$0xff]
    %v1356 = vld [vmem:[%s6 + $0x18] sm:$0xff]
    %v1357 = vld [vmem:[%s6 + $0x20] sm:$0xff]
    %v1358 = vld [vmem:[%s6 + $0x28] sm:$0xff]
    %v1359 = vld [vmem:[%s6 + $0x30] sm:$0xff]
    %v1360 = vld [vmem:[%s6 + $0x38] sm:$0xff]
    %v1361 = vld [vmem:[%s6 + $0x40] sm:$0xff]
    %v1362 = vld [vmem:[%s6 + $0x48] sm:$0xff]
    %v1363 = vld [vmem:[%s6 + $0x50] sm:$0xff]
    %v1364 = vld [vmem:[%s6 + $0x58] sm:$0xff]
    %v1365 = vld [vmem:[%s6 + $0x60] sm:$0xff]
    %v1366 = vld [vmem:[%s6 + $0x68] sm:$0xff]
    %v1367 = vld [vmem:[%s6 + $0x70] sm:$0xff]
    %v1368 = vld [vmem:[%s6 + $0x78] sm:$0xff]
    %1369 = vmatprep.subr.mxu0 0.0
    %1370 = vmatpush1.msra.mxu0 %v1353
    %1371 = vmatprep.subr.mxu0 0.0
    %1372 = vmatpush1.msra.mxu0 %v1354
    %1373 = vmatprep.subr.mxu0 0.0
    %1374 = vmatpush1.msra.mxu0 %v1355
    %1375 = vmatprep.subr.mxu0 0.0
    %1376 = vmatpush1.msra.mxu0 %v1356
    %1377 = vmatprep.subr.mxu0 0.0
    %1378 = vmatpush1.msra.mxu0 %v1357
    %1379 = vmatprep.subr.mxu0 0.0
    %1380 = vmatpush1.msra.mxu0 %v1358
    %1381 = vmatprep.subr.mxu0 0.0
    %1382 = vmatpush1.msra.mxu0 %v1359
    %1383 = vmatprep.subr.mxu0 0.0
    %1384 = vmatpush1.msra.mxu0 %v1360
    %1385 = vmatprep.subr.mxu0 0.0
    %1386 = vmatpush1.msra.mxu0 %v1361
    %1387 = vmatprep.subr.mxu0 0.0
    %1388 = vmatpush1.msra.mxu0 %v1362
    %1389 = vmatprep.subr.mxu0 0.0
    %1390 = vmatpush1.msra.mxu0 %v1363
    %1391 = vmatprep.subr.mxu0 0.0
    %1392 = vmatpush1.msra.mxu0 %v1364
    %1393 = vmatprep.subr.mxu0 0.0
    %1394 = vmatpush1.msra.mxu0 %v1365
    %1395 = vmatprep.subr.mxu0 0.0
    %1396 = vmatpush1.msra.mxu0 %v1366
    %1397 = vmatprep.subr.mxu0 0.0
    %1398 = vmatpush1.msra.mxu0 %v1367
    %1399 = vmatprep.subr.mxu0 0.0
    %1400 = vmatpush1.msra.mxu0 %v1368
    %1401 = vmatprep.subr.mxu0 0.0
    %1402 = vmatpush1.msra.mxu0 0.0
    %1403 = vmatprep.subr.mxu0 0.0
    %1404 = vmatpush1.msra.mxu0 0.0
    %1405 = vmatprep.subr.mxu0 0.0
    %1406 = vmatpush1.msra.mxu0 0.0
    %1407 = vmatprep.subr.mxu0 0.0
    %1408 = vmatpush1.msra.mxu0 0.0
    %1409 = vmatprep.subr.mxu0 0.0
    %1410 = vmatpush1.msra.mxu0 0.0
    %1411 = vmatprep.subr.mxu0 0.0
    %1412 = vmatpush1.msra.mxu0 0.0
    %1413 = vmatprep.subr.mxu0 0.0
    %1414 = vmatpush1.msra.mxu0 0.0
    %1415 = vmatprep.subr.mxu0 0.0
    %1416 = vmatpush1.msra.mxu0 0.0
    %1417 = vmatprep.subr.mxu0 0.0
    %1418 = vmatpush1.msra.mxu0 0.0
    %1419 = vmatprep.subr.mxu0 0.0
    %1420 = vmatpush1.msra.mxu0 0.0
    %1421 = vmatprep.subr.mxu0 0.0
    %1422 = vmatpush1.msra.mxu0 0.0
    %1423 = vmatprep.subr.mxu0 0.0
    %1424 = vmatpush1.msra.mxu0 0.0
    %1425 = vmatprep.subr.mxu0 0.0
    %1426 = vmatpush1.msra.mxu0 0.0
    %1427 = vmatprep.subr.mxu0 0.0
    %1428 = vmatpush1.msra.mxu0 0.0
    %1429 = vmatprep.subr.mxu0 0.0
    %1430 = vmatpush1.msra.mxu0 0.0
    %1431 = vmatprep.subr.mxu0 0.0
    %1432 = vmatpush1.msra.mxu0 0.0
    %1433 = vmatprep.mubr.f32.mxu0 0.0
    %1434 = vmatmul.mubr.f32.gmra.mrb[0].mxu0 %v1352
    %v1435 = vpop.f32.mrb[0].mxu0
    %v1436 = vadd.f32 0.0, %v1435
    %v1437 = vpop.f32.mrb[0].mxu0
    %1438 = vdwg.mxu0
    %v1439 = vmul.f32 %v1436, 0.00048828125
    %v1440 = vmul.f32 %v1439, %v1439
    %v1442 = vrot.slane %v1440, 7
    %v1444 = vsub.f32 %v1439, %v1442
    %v1445 = vmax.f32 %v1444, 0.0
    %v1446 = vld [vmem:[%s12] sm:$0x1]
    %v1447 = vadd.f32 %v1445, 1e-05
    %v1448 = vrsqrt.pop %v1447
    %v1451 = vunpack.c.l.s4 1966171168
    %v1452 = vunpack.c.0.s8 %v1451
    %v1453 = vlaneseq
    %v1454 = vshrl.u32 %v1453, 7
    %v1455 = vsub.s32 %v1452, %v1454
    %v1456 = vrot.slane %v1448, %v1455
    %v1457 = vcombine.high %v1456, %v1456
    %v1459 = vunpack.c.l.s4 1966171168
    %v1460 = vunpack.c.0.s8 %v1459
    %v1461 = vlaneseq
    %v1462 = vshrl.u32 %v1461, 7
    %v1463 = vsub.s32 %v1460, %v1462
    %v1464 = vrot.slane %v1457, %v1463
    %v1466 = vmul.f32 %v1446, %v1464
    %v1467 = vld [vmem:[%s13] sm:$0x1]
    %v1468 = vmul.f32 %v1439, %v1466
    %v1469 = vsub.f32 %v1467, %v1468
    %v1471 = vlaneseq
    %v1472 = vshrl.u32 %v1471, 7
    %v1473 = vsub.s32 0, %v1472
    %v1474 = vrot.slane %v1469, %v1473
    %v1476 = vsel %vm85, %v1466, %v1474
    %v1477 = vld [vmem:[%s7] sm:$0xf]
    %vm1478 = vcmask 31744
    %v1480 = vsel %vm1478, %v1476, 0
    %vm1482 = vcmask 1043456
    %v1484 = vsel %vm1482, %v1477, 0
    %1486 = vmatprep.subr.mxu0 0.0
    %1487 = vmatpush1.msra.mxu0 %v1484
    %1488 = vmatprep.subr.mxu0 0.0
    %1489 = vmatpush1.msra.mxu0 0.0
    %1490 = vmatprep.subr.mxu0 0.0
    %1491 = vmatpush1.msra.mxu0 0.0
    %1492 = vmatprep.subr.mxu0 0.0
    %1493 = vmatpush1.msra.mxu0 0.0
    %1494 = vmatprep.subr.mxu0 0.0
    %1495 = vmatpush1.msra.mxu0 0.0
    %1496 = vmatprep.subr.mxu0 0.0
    %1497 = vmatpush1.msra.mxu0 0.0
    %1498 = vmatprep.subr.mxu0 0.0
    %1499 = vmatpush1.msra.mxu0 0.0
    %1500 = vmatprep.subr.mxu0 0.0
    %1501 = vmatpush1.msra.mxu0 0.0
    %1502 = vmatprep.subr.mxu0 0.0
    %1503 = vmatpush1.msra.mxu0 0.0
    %1504 = vmatprep.subr.mxu0 0.0
    %1505 = vmatpush1.msra.mxu0 0.0
    %1506 = vmatprep.subr.mxu0 0.0
    %1507 = vmatpush1.msra.mxu0 0.0
    %1508 = vmatprep.subr.mxu0 0.0
    %1509 = vmatpush1.msra.mxu0 0.0
    %1510 = vmatprep.subr.mxu0 0.0
    %1511 = vmatpush1.msra.mxu0 0.0
    %1512 = vmatprep.subr.mxu0 0.0
    %1513 = vmatpush1.msra.mxu0 0.0
    %1514 = vmatprep.subr.mxu0 0.0
    %1515 = vmatpush1.msra.mxu0 0.0
    %1516 = vmatprep.subr.mxu0 0.0
    %1517 = vmatpush1.msra.mxu0 0.0
    %1518 = vmatprep.subr.mxu0 0.0
    %1519 = vmatpush1.msra.mxu0 0.0
    %1520 = vmatprep.subr.mxu0 0.0
    %1521 = vmatpush1.msra.mxu0 0.0
    %1522 = vmatprep.subr.mxu0 0.0
    %1523 = vmatpush1.msra.mxu0 0.0
    %1524 = vmatprep.subr.mxu0 0.0
    %1525 = vmatpush1.msra.mxu0 0.0
    %1526 = vmatprep.subr.mxu0 0.0
    %1527 = vmatpush1.msra.mxu0 0.0
    %1528 = vmatprep.subr.mxu0 0.0
    %1529 = vmatpush1.msra.mxu0 0.0
    %1530 = vmatprep.subr.mxu0 0.0
    %1531 = vmatpush1.msra.mxu0 0.0
    %1532 = vmatprep.subr.mxu0 0.0
    %1533 = vmatpush1.msra.mxu0 0.0
    %1534 = vmatprep.subr.mxu0 0.0
    %1535 = vmatpush1.msra.mxu0 0.0
    %1536 = vmatprep.subr.mxu0 0.0
    %1537 = vmatpush1.msra.mxu0 0.0
    %1538 = vmatprep.subr.mxu0 0.0
    %1539 = vmatpush1.msra.mxu0 0.0
    %1540 = vmatprep.subr.mxu0 0.0
    %1541 = vmatpush1.msra.mxu0 0.0
    %1542 = vmatprep.subr.mxu0 0.0
    %1543 = vmatpush1.msra.mxu0 0.0
    %1544 = vmatprep.subr.mxu0 0.0
    %1545 = vmatpush1.msra.mxu0 0.0
    %1546 = vmatprep.subr.mxu0 0.0
    %1547 = vmatpush1.msra.mxu0 0.0
    %1548 = vmatprep.subr.mxu0 0.0
    %1549 = vmatpush1.msra.mxu0 0.0
    %1550 = vmatprep.mubr.f32.mxu0 0.0
    %1551 = vmatmul.mubr.f32.gmra.mrb[0].mxu0 %v1480
    %v1552 = vpop.f32.mrb[0].mxu0
    %v1553 = vadd.f32 0.0, %v1552
    %v1554 = vpop.f32.mrb[0].mxu0
    %1555 = vdwg.mxu0
    %v1556 = vlaneseq
    %v1557 = vshrl.u32 %v1556, 7
    %v1558 = vsub.s32 0, %v1557
    %v1559 = vrot.slane %v1553, %v1558
    %v1560 = vmul.f32 %v1176, %v1559
    %v1561 = vmul.f32 %v1182, %v1559
    %v1562 = vmul.f32 %v1188, %v1559
    %v1563 = vmul.f32 %v1194, %v1559
    %v1564 = vlaneseq
    %v1565 = vshrl.u32 %v1564, 7
    %v1566 = vsub.s32 1, %v1565
    %v1567 = vrot.slane %v1553, %v1566
    %v1568 = vadd.f32 %v1560, %v1567
    %v1569 = vadd.f32 %v1561, %v1567
    %v1570 = vadd.f32 %v1562, %v1567
    %v1571 = vadd.f32 %v1563, %v1567
    %v1572 = vmax.f32 %v1568, 0.0
    %v1573 = vmax.f32 %v1569, 0.0
    %v1574 = vmax.f32 %v1570, 0.0
    %v1575 = vmax.f32 %v1571, 0.0
    %v1576 = vmul.f32 %v1302, %v1559
    %v1577 = vmul.f32 %v1303, %v1559
    %v1578 = vmul.f32 %v1304, %v1559
    %v1579 = vmul.f32 %v1305, %v1559
    %v1580 = vadd.f32 %v1576, %v1567
    %v1581 = vadd.f32 %v1577, %v1567
    %v1582 = vadd.f32 %v1578, %v1567
    %v1583 = vadd.f32 %v1579, %v1567
    %v1584 = vmax.f32 %v1580, 0.0
    %v1585 = vmax.f32 %v1581, 0.0
    %v1586 = vmax.f32 %v1582, 0.0
    %v1587 = vmax.f32 %v1583, 0.0
    %1588 = vst [vmem:[%s16] sm:$0xff] %v1572
    %1589 = vst [vmem:[%s16 + $0x8] sm:$0xff] %v1584
    %1590 = vst [vmem:[%s16 + $0x10] sm:$0xff] %v1573
    %1591 = vst [vmem:[%s16 + $0x18] sm:$0xff] %v1585
    %1592 = vst [vmem:[%s16 + $0x20] sm:$0xff] %v1574
    %1593 = vst [vmem:[%s16 + $0x28] sm:$0xff] %v1586
    %1594 = vst [vmem:[%s16 + $0x30] sm:$0xff] %v1575
    %1595 = vst [vmem:[%s16 + $0x38] sm:$0xff] %v1587
    // Predicated region
    $region70: #{_forward.1} parent=1 // pred_check
      _
    $region71: #{_forward.1} parent=1 // pred_check_branch
      %1597 = sbr.rel (0) target = $region73
    $region72: #{_forward.1} parent=1 // pred_region
      _
    $region73: #{_forward.1} parent=1 // pred_fallthru
      _
    // Predicated region
    $region74: #{_forward.1} parent=1 // pred_check
      _
    $region75: #{_forward.1} parent=1 // pred_check_branch
      %1599 = sbr.rel (0) target = $region77
    $region76: #{_forward.1} parent=1 // pred_region
      _
    $region77: #{_forward.1} parent=1 // pred_fallthru
      _
    %1600 = vsyncpa [#allocation3], 1

</llo_original>
